<compile_context>
chip_gen: v6e
topology: v6e:2x2x1
jax: 0.10.0
libtpu: 0.0.40
codegen_flags: <defaults>
</compile_context>

<pallas_src>
import functools

import numpy as np
import jax
import jax.numpy as jnp
from jax import lax
from jax.experimental import pallas as pl
from jax.experimental.pallas import tpu as pltpu


# ----------------------- butterfly bookkeeping (python) ----------------------

def _power_of_two(v):
    return v & (v - 1) == 0


def _next_power_of_two(v):
    p = 1
    while p < v:
        p *= 2
    return p


def butterfly_sequence(inputs, outputs):
    assert _power_of_two(inputs) and _power_of_two(outputs)
    assert inputs >= 2 and outputs <= inputs ** 2
    current_inputs = inputs
    current_butterfly = inputs
    while current_butterfly >= 2:
        if outputs > current_inputs:
            current_outputs = current_inputs * 2
        elif outputs < current_inputs:
            current_outputs = current_inputs // 2
        else:
            current_outputs = current_inputs
        yield current_inputs, current_outputs, current_butterfly
        current_inputs = current_outputs
        current_butterfly //= 2


def _wing_swap_perm(channels, butterfly_size):
    """Static channel permutation implementing Conv2dSublayer.swap_wings."""
    ws = butterfly_size // 2
    perm = []
    for c in range(channels):
        b_idx, rem = divmod(c, butterfly_size)
        wing, pos = divmod(rem, ws)
        perm.append(b_idx * butterfly_size + (1 - wing) * ws + pos)
    return tuple(perm)


# ------------------------- host-side table construction ----------------------

def _host_tap_tables(H, W, K):
    """Lane shifts + zero-padding masks for a stride-1 'same' KxK stencil on a
    flattened (H*W,) lane axis.

    out[p] uses x[(p + s) mod HW] with s = (di - pad)*W + (dj - pad); the mask
    zeroes every output position whose source index falls outside the image
    (this IS the zero padding -- no jnp.pad copy needed)."""
    pad = K // 2
    HW = H * W
    ii = np.arange(HW) // W
    jj = np.arange(HW) % W
    shifts, full_valid = [], []
    masks = np.zeros((K * K, 1, HW), np.float32)
    for di in range(K):
        for dj in range(K):
            ri, rj = di - pad, dj - pad
            kk = di * K + dj
            valid = ((ii + ri >= 0) & (ii + ri < H) &
                     (jj + rj >= 0) & (jj + rj < W))
            masks[kk, 0] = valid.astype(np.float32)
            shifts.append(int((-(ri * W + rj)) % HW))
            full_valid.append(bool(valid.all()))
    return tuple(shifts), tuple(full_valid), masks


def _choose_batch_tile(B, C):
    """Smallest batch tile Bt dividing B with Bt*C a multiple of 8, so every
    f32 vreg / store is fully sublane-occupied.  Smallest keeps the most
    'parallel' grid steps (v7x has 2 TensorCores per chip)."""
    for bt in range(1, B + 1):
        if B % bt == 0 and (bt * C) % 8 == 0:
            return bt
    return 1   # fallback: half-occupied sublanes, still correct


def _build_fold_matrices(layers, C, K, Bt):
    """Per-sublayer (Bt*C, KK*Bt*C) fold matrices for the MXU.

    Row r = bb*C + c maps the stacked shifted/masked tap images
    (row kk*Bt*C + bb*C + c') to output channel c of packed batch element bb:
        out[c] = sum_kk ( w_even[c,kk]       * tap_kk[c]
                        + w_odd[perm(c),kk]  * tap_kk[perm(c)] )
    i.e. the depthwise conv, even/odd split, wing swap and add of one
    Conv2dSublayer collapse into a single sparse matrix, block-diagonal over
    the Bt batch elements packed into the slab."""
    KK = K * K
    eye_c = jnp.eye(C, dtype=jnp.float32)
    eye_b = jnp.eye(Bt, dtype=jnp.float32)
    mats = []
    for layer in layers:
        w = layer["w"].astype(jnp.float32)               # (2C, 1, K, K)
        w_e = w[0::2, 0].reshape(C, KK)                  # even stream weights
        w_o = w[1::2, 0].reshape(C, KK)                  # odd stream weights
        perm = np.asarray(_wing_swap_perm(C, layer["butterfly_size"]))
        pmat = np.zeros((C, C), np.float32)
        pmat[np.arange(C), perm] = 1.0                   # pmat[c, perm(c)] = 1
        pmat = jnp.asarray(pmat)
        m3 = (w_e[:, :, None] * eye_c[:, None, :]
              + w_o[perm][:, :, None] * pmat[:, None, :])          # (C, KK, C)
        m5 = eye_b[:, None, None, :, None] * m3[None, :, :, None, :]
        mats.append(m5.reshape(Bt * C, KK * Bt * C))
    # TODO(synk): for large Bt*C the block-diagonal expansion wastes VMEM;
    # switch to a batched einsum over a (C, KK*C) matrix instead.
    return jnp.stack(mats, axis=0)                       # (L, Bt*C, KK*Bt*C)


# ----------------------------- Pallas kernels --------------------------------

def _fused_butterfly_kernel(x_ref, m_ref, mask_ref, y_ref, sum_ref, ssq_ref, *,
                            num_layers, KK, shifts, full_valid):
    """All butterfly sublayers + BatchNorm statistics for one packed slab.

    x_ref   : VMEM (R, HW)       R = Bt*C rows (batch-packed, sublane dense)
    m_ref   : VMEM (L, R, KK*R)  folded stencil+wing-swap matrices (see above)
    mask_ref: VMEM (KK, 1, HW)   zero-padding masks, one per stencil tap
    y_ref   : VMEM (R, HW)       pre-BatchNorm activation (output)
    sum_ref : VMEM (R, 1)        per-row sum      (BN partial stats)
    ssq_ref : VMEM (R, 1)        per-row sum(x^2) (BN partial stats)
    """
    x = x_ref[...].astype(jnp.float32)                   # (R, HW)

    for l in range(num_layers):
        taps = []
        for kk in range(KK):
            sh = shifts[kk]
            # Shifted, zero-padded image for this tap: one XLU lane roll plus
            # a broadcast mask multiply.  Correct because every row is a full
            # H*W image, so the roll wraps within that image.
            xs = x if sh == 0 else pltpu.roll(x, sh, axis=1)
            if not full_valid[kk]:
                xs = xs * mask_ref[kk]                    # (1, HW) broadcast
            taps.append(xs)
        xs_all = jnp.concatenate(taps, axis=0)            # (KK*R, HW)
        # Entire depthwise stencil + butterfly wing swap as ONE matmul per
        # sublayer on the otherwise-idle MXU (the VALU was the binding slot
        # before).  HIGHEST precision keeps the f32 activations exact (no
        # silent bf16 truncation on the MXU input path).
        x = jnp.dot(m_ref[l], xs_all,
                    preferred_element_type=jnp.float32,
                    precision=lax.Precision.HIGHEST)

    y_ref[...] = x
    # One-pass BatchNorm partial statistics for this slab (f32).
    sum_ref[...] = jnp.sum(x, axis=1, keepdims=True)
    ssq_ref[...] = jnp.sum(x * x, axis=1, keepdims=True)


def _bn_apply_kernel(y_ref, p_ref, o_ref):
    """Per-row affine: out = y * scale + shift (row = batch*channel).
    Writes in place over y via input_output_aliases."""
    o_ref[...] = y_ref[...] * p_ref[:, 0:1] + p_ref[:, 1:2]


# ------------------------------ jitted forward builder ------------------------

@functools.lru_cache(maxsize=None)
def _build_forward_fn(B, C, H, W, K, Bt, L, shifts, full_valid, eps):
    KK, HW = K * K, H * W
    R = Bt * C                       # packed rows per grid step (multiple of 8)
    steps = B // Bt
    elems = B * C * HW

    kernel = functools.partial(_fused_butterfly_kernel, num_layers=L, KK=KK,
                               shifts=shifts, full_valid=full_valid)

    # TODO(synk): for large C / H*W (v7x: 64 MiB VMEM, 2 TensorCores) add a
    # spatial grid axis with an explicit (K-1)-row halo (the roll+mask trick
    # only wraps correctly over a full H*W slab) and keep >= 2 parallel steps.
    fused = pl.pallas_call(
        kernel,
        out_shape=(jax.ShapeDtypeStruct((B * C, HW), jnp.float32),
                   jax.ShapeDtypeStruct((B * C, 1), jnp.float32),
                   jax.ShapeDtypeStruct((B * C, 1), jnp.float32)),
        grid=(steps,),
        in_specs=[
            pl.BlockSpec((R, HW), lambda b: (b, 0)),
            pl.BlockSpec((L, R, KK * R), lambda b: (0, 0, 0)),
            pl.BlockSpec((KK, 1, HW), lambda b: (0, 0, 0)),
        ],
        out_specs=(
            pl.BlockSpec((R, HW), lambda b: (b, 0)),
            pl.BlockSpec((R, 1), lambda b: (b, 0)),
            pl.BlockSpec((R, 1), lambda b: (b, 0)),
        ),
        compiler_params=pltpu.CompilerParams(
            dimension_semantics=("parallel",),
            vmem_limit_bytes=64 * 1024 * 1024),
        cost_estimate=pl.CostEstimate(
            flops=2 * steps * L * R * (KK * R) * HW + 4 * L * KK * elems,
            transcendentals=0,
            bytes_accessed=2 * elems * 4),
    )

    bn_apply = pl.pallas_call(
        _bn_apply_kernel,
        out_shape=jax.ShapeDtypeStruct((B * C, HW), jnp.float32),
        grid=(steps,),
        in_specs=[pl.BlockSpec((R, HW), lambda b: (b, 0)),
                  pl.BlockSpec((R, 2), lambda b: (b, 0))],
        out_specs=pl.BlockSpec((R, HW), lambda b: (b, 0)),
        input_output_aliases={0: 0},     # normalise y in place (no extra HBM alloc)
        compiler_params=pltpu.CompilerParams(
            dimension_semantics=("parallel",),
            vmem_limit_bytes=64 * 1024 * 1024),
        cost_estimate=pl.CostEstimate(
            flops=2 * elems, transcendentals=0, bytes_accessed=2 * elems * 4),
    )

    def forward(x, m_full, masks, gamma, beta):
        xf = x.reshape(B * C, HW)                        # metadata-only reshape
        y, csum, csq = fused(xf, m_full, masks)
        # O(C) statistics glue; the heavy per-element reductions already
        # happened in the fused kernel's epilogue.
        n = float(B * HW)
        mean = jnp.sum(csum.reshape(B, C), axis=0) / n            # (C,)
        var = jnp.sum(csq.reshape(B, C), axis=0) / n - mean * mean
        scale = gamma.astype(jnp.float32) * lax.rsqrt(var + eps)
        shift = beta.astype(jnp.float32) - mean * scale
        p = jnp.stack([jnp.tile(scale, B), jnp.tile(shift, B)], axis=-1)
        out = bn_apply(y, p)
        return out.reshape(B, C, H, W)

    return jax.jit(forward)


# --------------------------- parameters & forward ----------------------------

def init_butterfly_conv2d(key, in_channels, out_channels, kernel_size,
                          stride=1, padding=0):
    """Deterministic parameter construction mirroring Conv2d.__init__."""
    assert in_channels > 2, "in_channels<=2 falls back to plain conv in torch"
    assert _power_of_two(in_channels) and _power_of_two(out_channels)
    # TODO(synk): expand_inputs / trim_outputs (non-power-of-two channels) and
    # expansion/contraction sublayers (out_channels != in_channels) are not
    # implemented; this demo exercises the power-of-two, equal-channel path.
    layers = []
    cur_stride, cur_padding = stride, padding
    for ci, co, size in butterfly_sequence(_next_power_of_two(in_channels),
                                           _next_power_of_two(out_channels)):
        assert ci == co
        expansion = max(1, co // in_channels)
        key, sub = jax.random.split(key)
        fan_in = kernel_size * kernel_size
        bound = 1.0 / (fan_in ** 0.5)
        w = jax.random.uniform(sub, (2 * ci, 1, kernel_size, kernel_size),
                               jnp.float32, -bound, bound)
        layers.append(dict(w=w, butterfly_size=size * expansion,
                           stride=cur_stride, padding=cur_padding))
        cur_padding = kernel_size // 2
        cur_stride = 1
    gamma = jnp.ones((out_channels,), jnp.float32)   # BatchNorm2d defaults
    beta = jnp.zeros((out_channels,), jnp.float32)
    return dict(layers=layers, gamma=gamma, beta=beta)


def butterfly_conv2d_forward(x, params, eps=1e-5):
    B, C, H, W = x.shape
    layers = params["layers"]
    K = layers[0]["w"].shape[-1]

    for layer in layers:
        # TODO(synk): general stride / padding on the first sublayer (changes
        # the per-layer spatial size); the fused kernel covers the stride=1,
        # padding=K//2 ("same") configuration exercised here.
        assert layer["stride"] == 1 and layer["padding"] == K // 2
        assert layer["w"].shape == (2 * C, 1, K, K)
        assert C % layer["butterfly_size"] == 0

    Bt = _choose_batch_tile(B, C)
    shifts, full_valid, masks_np = _host_tap_tables(H, W, K)
    m_full = _build_fold_matrices(layers, C, K, Bt)   # (L, Bt*C, KK*Bt*C)
    masks = jnp.asarray(masks_np)                     # (KK, 1, HW)

    fwd = _build_forward_fn(B, C, H, W, K, Bt, len(layers),
                            shifts, full_valid, float(eps))
    return fwd(x, m_full, masks, params["gamma"], params["beta"])


# ------------------------------ pure-JAX reference ---------------------------

def _ref_sublayer(x, w, butterfly_size, stride, padding):
    C = x.shape[1]
    inter = lax.conv_general_dilated(
        x, w, window_strides=(stride, stride),
        padding=[(padding, padding), (padding, padding)],
        dimension_numbers=("NCHW", "OIHW", "NCHW"),
        feature_group_count=C)
    x1 = inter[:, 0::2]
    x2 = inter[:, 1::2]
    perm = jnp.asarray(_wing_swap_perm(C, butterfly_size))
    return x1 + x2[:, perm]


def reference_forward(x, params, eps=1e-5):
    y = x.astype(jnp.float32)
    for layer in params["layers"]:
        y = _ref_sublayer(y, layer["w"], layer["butterfly_size"],
                          layer["stride"], layer["padding"])
    mean = y.mean(axis=(0, 2, 3), keepdims=True)
    var = ((y - mean) ** 2).mean(axis=(0, 2, 3), keepdims=True)
    y = (y - mean) / jnp.sqrt(var + eps)
    return (y * params["gamma"][None, :, None, None]
            + params["beta"][None, :, None, None])


# ------------------------------------ main -----------------------------------

if __name__ == "__main__":
    key = jax.random.PRNGKey(0)
    kx, kp = jax.random.split(key)

    B, Cin, Cout, H, W, K = 2, 4, 4, 16, 16, 3
    x = jax.random.normal(kx, (B, Cin, H, W), jnp.float32)
    params = init_butterfly_conv2d(kp, Cin, Cout, K, stride=1, padding=1)

    out = jax.block_until_ready(butterfly_conv2d_forward(x, params))
    ref = jax.block_until_ready(reference_forward(x, params))

    assert out.shape == (B, Cout, H, W), out.shape
    max_err = float(jnp.max(jnp.abs(out - ref)))
    assert jnp.allclose(out, ref, atol=1e-4, rtol=1e-4), max_err
    print("KERNEL_OK")
</pallas_src>

<mosaic_0001>
module attributes {stable_mosaic.version = 11 : i64} {
  func.func @_fused_butterfly_kernel(%arg0: i32, %arg1: memref<8x256xf32, #tpu.memory_space<vmem>>, %arg2: memref<2x8x72xf32, #tpu.memory_space<vmem>>, %arg3: memref<9x1x256xf32, #tpu.memory_space<vmem>>, %arg4: memref<8x256xf32, #tpu.memory_space<vmem>>, %arg5: memref<8x1xf32, #tpu.memory_space<vmem>>, %arg6: memref<8x1xf32, #tpu.memory_space<vmem>>) attributes {dimension_semantics = [#tpu.dimension_semantics<parallel>], iteration_bounds = array<i64: 1>, scalar_prefetch = 0 : i64, scratch_operands = 0 : i64, tpu.core_type = #tpu.core_type<tc>, window_params = [{transform_indices = @transform_0, window_bounds = array<i64: 8, 256>}, {pipeline_mode = #tpu.pipeline_mode<synchronous>, transform_indices = @transform_1, window_bounds = array<i64: 2, 8, 72>}, {pipeline_mode = #tpu.pipeline_mode<synchronous>, transform_indices = @transform_2, window_bounds = array<i64: 9, 1, 256>}, {transform_indices = @transform_3, window_bounds = array<i64: 8, 256>}, {transform_indices = @transform_4, window_bounds = array<i64: 8, 1>}, {transform_indices = @transform_5, window_bounds = array<i64: 8, 1>}]} {
    %c0 = arith.constant 0 : index
    %c0_0 = arith.constant 0 : index
    %0 = vector.load %arg1[%c0, %c0_0] : memref<8x256xf32, #tpu.memory_space<vmem>>, vector<8x256xf32>
    %c17_i32 = arith.constant 17 : i32
    %1 = tpu.dynamic_rotate %0 by %c17_i32 dim 1 : vector<8x256xf32>, i32 -> vector<8x256xf32>
    %c0_1 = arith.constant 0 : index
    %c0_2 = arith.constant 0 : index
    %c0_3 = arith.constant 0 : index
    %2 = vector.load %arg3[%c0_1, %c0_2, %c0_3] : memref<9x1x256xf32, #tpu.memory_space<vmem>>, vector<1x1x256xf32>
    %3 = vector.shape_cast %2 : vector<1x1x256xf32> to vector<1x256xf32>
    %4 = vector.broadcast %3 : vector<1x256xf32> to vector<8x256xf32>
    %5 = arith.mulf %1, %4 : vector<8x256xf32>
    %c16_i32 = arith.constant 16 : i32
    %6 = tpu.dynamic_rotate %0 by %c16_i32 dim 1 : vector<8x256xf32>, i32 -> vector<8x256xf32>
    %c1 = arith.constant 1 : index
    %c0_4 = arith.constant 0 : index
    %c0_5 = arith.constant 0 : index
    %7 = vector.load %arg3[%c1, %c0_4, %c0_5] : memref<9x1x256xf32, #tpu.memory_space<vmem>>, vector<1x1x256xf32>
    %8 = vector.shape_cast %7 : vector<1x1x256xf32> to vector<1x256xf32>
    %9 = vector.broadcast %8 : vector<1x256xf32> to vector<8x256xf32>
    %10 = arith.mulf %6, %9 : vector<8x256xf32>
    %c15_i32 = arith.constant 15 : i32
    %11 = tpu.dynamic_rotate %0 by %c15_i32 dim 1 : vector<8x256xf32>, i32 -> vector<8x256xf32>
    %c2 = arith.constant 2 : index
    %c0_6 = arith.constant 0 : index
    %c0_7 = arith.constant 0 : index
    %12 = vector.load %arg3[%c2, %c0_6, %c0_7] : memref<9x1x256xf32, #tpu.memory_space<vmem>>, vector<1x1x256xf32>
    %13 = vector.shape_cast %12 : vector<1x1x256xf32> to vector<1x256xf32>
    %14 = vector.broadcast %13 : vector<1x256xf32> to vector<8x256xf32>
    %15 = arith.mulf %11, %14 : vector<8x256xf32>
    %c1_i32 = arith.constant 1 : i32
    %16 = tpu.dynamic_rotate %0 by %c1_i32 dim 1 : vector<8x256xf32>, i32 -> vector<8x256xf32>
    %c3 = arith.constant 3 : index
    %c0_8 = arith.constant 0 : index
    %c0_9 = arith.constant 0 : index
    %17 = vector.load %arg3[%c3, %c0_8, %c0_9] : memref<9x1x256xf32, #tpu.memory_space<vmem>>, vector<1x1x256xf32>
    %18 = vector.shape_cast %17 : vector<1x1x256xf32> to vector<1x256xf32>
    %19 = vector.broadcast %18 : vector<1x256xf32> to vector<8x256xf32>
    %20 = arith.mulf %16, %19 : vector<8x256xf32>
    %c255_i32 = arith.constant 255 : i32
    %21 = tpu.dynamic_rotate %0 by %c255_i32 dim 1 : vector<8x256xf32>, i32 -> vector<8x256xf32>
    %c5 = arith.constant 5 : index
    %c0_10 = arith.constant 0 : index
    %c0_11 = arith.constant 0 : index
    %22 = vector.load %arg3[%c5, %c0_10, %c0_11] : memref<9x1x256xf32, #tpu.memory_space<vmem>>, vector<1x1x256xf32>
    %23 = vector.shape_cast %22 : vector<1x1x256xf32> to vector<1x256xf32>
    %24 = vector.broadcast %23 : vector<1x256xf32> to vector<8x256xf32>
    %25 = arith.mulf %21, %24 : vector<8x256xf32>
    %c241_i32 = arith.constant 241 : i32
    %26 = tpu.dynamic_rotate %0 by %c241_i32 dim 1 : vector<8x256xf32>, i32 -> vector<8x256xf32>
    %c6 = arith.constant 6 : index
    %c0_12 = arith.constant 0 : index
    %c0_13 = arith.constant 0 : index
    %27 = vector.load %arg3[%c6, %c0_12, %c0_13] : memref<9x1x256xf32, #tpu.memory_space<vmem>>, vector<1x1x256xf32>
    %28 = vector.shape_cast %27 : vector<1x1x256xf32> to vector<1x256xf32>
    %29 = vector.broadcast %28 : vector<1x256xf32> to vector<8x256xf32>
    %30 = arith.mulf %26, %29 : vector<8x256xf32>
    %c240_i32 = arith.constant 240 : i32
    %31 = tpu.dynamic_rotate %0 by %c240_i32 dim 1 : vector<8x256xf32>, i32 -> vector<8x256xf32>
    %c7 = arith.constant 7 : index
    %c0_14 = arith.constant 0 : index
    %c0_15 = arith.constant 0 : index
    %32 = vector.load %arg3[%c7, %c0_14, %c0_15] : memref<9x1x256xf32, #tpu.memory_space<vmem>>, vector<1x1x256xf32>
    %33 = vector.shape_cast %32 : vector<1x1x256xf32> to vector<1x256xf32>
    %34 = vector.broadcast %33 : vector<1x256xf32> to vector<8x256xf32>
    %35 = arith.mulf %31, %34 : vector<8x256xf32>
    %c239_i32 = arith.constant 239 : i32
    %36 = tpu.dynamic_rotate %0 by %c239_i32 dim 1 : vector<8x256xf32>, i32 -> vector<8x256xf32>
    %c8 = arith.constant 8 : index
    %c0_16 = arith.constant 0 : index
    %c0_17 = arith.constant 0 : index
    %37 = vector.load %arg3[%c8, %c0_16, %c0_17] : memref<9x1x256xf32, #tpu.memory_space<vmem>>, vector<1x1x256xf32>
    %38 = vector.shape_cast %37 : vector<1x1x256xf32> to vector<1x256xf32>
    %39 = vector.broadcast %38 : vector<1x256xf32> to vector<8x256xf32>
    %40 = arith.mulf %36, %39 : vector<8x256xf32>
    %41 = tpu.concatenate %5, %10, %15, %20, %0, %25, %30, %35, %40 in 0 : vector<8x256xf32>, vector<8x256xf32>, vector<8x256xf32>, vector<8x256xf32>, vector<8x256xf32>, vector<8x256xf32>, vector<8x256xf32>, vector<8x256xf32>, vector<8x256xf32> -> vector<72x256xf32>
    %c0_18 = arith.constant 0 : index
    %c0_19 = arith.constant 0 : index
    %c0_20 = arith.constant 0 : index
    %42 = vector.load %arg2[%c0_18, %c0_19, %c0_20] : memref<2x8x72xf32, #tpu.memory_space<vmem>>, vector<1x8x72xf32>
    %43 = vector.shape_cast %42 : vector<1x8x72xf32> to vector<8x72xf32>
    %cst = arith.constant dense<0.000000e+00> : vector<8x256xf32>
    %44 = tpu.matmul %43, %41, %cst {dimension_numbers = #tpu.dot_dimension_numbers<[1], [0], [0], [1], [0, 0, 1, 1], [], []>, precision = #tpu.contract_precision<fp32>} : vector<8x72xf32>, vector<72x256xf32>, vector<8x256xf32> -> vector<8x256xf32>
    %c17_i32_21 = arith.constant 17 : i32
    %45 = tpu.dynamic_rotate %44 by %c17_i32_21 dim 1 : vector<8x256xf32>, i32 -> vector<8x256xf32>
    %c0_22 = arith.constant 0 : index
    %c0_23 = arith.constant 0 : index
    %c0_24 = arith.constant 0 : index
    %46 = vector.load %arg3[%c0_22, %c0_23, %c0_24] : memref<9x1x256xf32, #tpu.memory_space<vmem>>, vector<1x1x256xf32>
    %47 = vector.shape_cast %46 : vector<1x1x256xf32> to vector<1x256xf32>
    %48 = vector.broadcast %47 : vector<1x256xf32> to vector<8x256xf32>
    %49 = arith.mulf %45, %48 : vector<8x256xf32>
    %c16_i32_25 = arith.constant 16 : i32
    %50 = tpu.dynamic_rotate %44 by %c16_i32_25 dim 1 : vector<8x256xf32>, i32 -> vector<8x256xf32>
    %c1_26 = arith.constant 1 : index
    %c0_27 = arith.constant 0 : index
    %c0_28 = arith.constant 0 : index
    %51 = vector.load %arg3[%c1_26, %c0_27, %c0_28] : memref<9x1x256xf32, #tpu.memory_space<vmem>>, vector<1x1x256xf32>
    %52 = vector.shape_cast %51 : vector<1x1x256xf32> to vector<1x256xf32>
    %53 = vector.broadcast %52 : vector<1x256xf32> to vector<8x256xf32>
    %54 = arith.mulf %50, %53 : vector<8x256xf32>
    %c15_i32_29 = arith.constant 15 : i32
    %55 = tpu.dynamic_rotate %44 by %c15_i32_29 dim 1 : vector<8x256xf32>, i32 -> vector<8x256xf32>
    %c2_30 = arith.constant 2 : index
    %c0_31 = arith.constant 0 : index
    %c0_32 = arith.constant 0 : index
    %56 = vector.load %arg3[%c2_30, %c0_31, %c0_32] : memref<9x1x256xf32, #tpu.memory_space<vmem>>, vector<1x1x256xf32>
    %57 = vector.shape_cast %56 : vector<1x1x256xf32> to vector<1x256xf32>
    %58 = vector.broadcast %57 : vector<1x256xf32> to vector<8x256xf32>
    %59 = arith.mulf %55, %58 : vector<8x256xf32>
    %c1_i32_33 = arith.constant 1 : i32
    %60 = tpu.dynamic_rotate %44 by %c1_i32_33 dim 1 : vector<8x256xf32>, i32 -> vector<8x256xf32>
    %c3_34 = arith.constant 3 : index
    %c0_35 = arith.constant 0 : index
    %c0_36 = arith.constant 0 : index
    %61 = vector.load %arg3[%c3_34, %c0_35, %c0_36] : memref<9x1x256xf32, #tpu.memory_space<vmem>>, vector<1x1x256xf32>
    %62 = vector.shape_cast %61 : vector<1x1x256xf32> to vector<1x256xf32>
    %63 = vector.broadcast %62 : vector<1x256xf32> to vector<8x256xf32>
    %64 = arith.mulf %60, %63 : vector<8x256xf32>
    %c255_i32_37 = arith.constant 255 : i32
    %65 = tpu.dynamic_rotate %44 by %c255_i32_37 dim 1 : vector<8x256xf32>, i32 -> vector<8x256xf32>
    %c5_38 = arith.constant 5 : index
    %c0_39 = arith.constant 0 : index
    %c0_40 = arith.constant 0 : index
    %66 = vector.load %arg3[%c5_38, %c0_39, %c0_40] : memref<9x1x256xf32, #tpu.memory_space<vmem>>, vector<1x1x256xf32>
    %67 = vector.shape_cast %66 : vector<1x1x256xf32> to vector<1x256xf32>
    %68 = vector.broadcast %67 : vector<1x256xf32> to vector<8x256xf32>
    %69 = arith.mulf %65, %68 : vector<8x256xf32>
    %c241_i32_41 = arith.constant 241 : i32
    %70 = tpu.dynamic_rotate %44 by %c241_i32_41 dim 1 : vector<8x256xf32>, i32 -> vector<8x256xf32>
    %c6_42 = arith.constant 6 : index
    %c0_43 = arith.constant 0 : index
    %c0_44 = arith.constant 0 : index
    %71 = vector.load %arg3[%c6_42, %c0_43, %c0_44] : memref<9x1x256xf32, #tpu.memory_space<vmem>>, vector<1x1x256xf32>
    %72 = vector.shape_cast %71 : vector<1x1x256xf32> to vector<1x256xf32>
    %73 = vector.broadcast %72 : vector<1x256xf32> to vector<8x256xf32>
    %74 = arith.mulf %70, %73 : vector<8x256xf32>
    %c240_i32_45 = arith.constant 240 : i32
    %75 = tpu.dynamic_rotate %44 by %c240_i32_45 dim 1 : vector<8x256xf32>, i32 -> vector<8x256xf32>
    %c7_46 = arith.constant 7 : index
    %c0_47 = arith.constant 0 : index
    %c0_48 = arith.constant 0 : index
    %76 = vector.load %arg3[%c7_46, %c0_47, %c0_48] : memref<9x1x256xf32, #tpu.memory_space<vmem>>, vector<1x1x256xf32>
    %77 = vector.shape_cast %76 : vector<1x1x256xf32> to vector<1x256xf32>
    %78 = vector.broadcast %77 : vector<1x256xf32> to vector<8x256xf32>
    %79 = arith.mulf %75, %78 : vector<8x256xf32>
    %c239_i32_49 = arith.constant 239 : i32
    %80 = tpu.dynamic_rotate %44 by %c239_i32_49 dim 1 : vector<8x256xf32>, i32 -> vector<8x256xf32>
    %c8_50 = arith.constant 8 : index
    %c0_51 = arith.constant 0 : index
    %c0_52 = arith.constant 0 : index
    %81 = vector.load %arg3[%c8_50, %c0_51, %c0_52] : memref<9x1x256xf32, #tpu.memory_space<vmem>>, vector<1x1x256xf32>
    %82 = vector.shape_cast %81 : vector<1x1x256xf32> to vector<1x256xf32>
    %83 = vector.broadcast %82 : vector<1x256xf32> to vector<8x256xf32>
    %84 = arith.mulf %80, %83 : vector<8x256xf32>
    %85 = tpu.concatenate %49, %54, %59, %64, %44, %69, %74, %79, %84 in 0 : vector<8x256xf32>, vector<8x256xf32>, vector<8x256xf32>, vector<8x256xf32>, vector<8x256xf32>, vector<8x256xf32>, vector<8x256xf32>, vector<8x256xf32>, vector<8x256xf32> -> vector<72x256xf32>
    %c1_53 = arith.constant 1 : index
    %c0_54 = arith.constant 0 : index
    %c0_55 = arith.constant 0 : index
    %86 = vector.load %arg2[%c1_53, %c0_54, %c0_55] : memref<2x8x72xf32, #tpu.memory_space<vmem>>, vector<1x8x72xf32>
    %87 = vector.shape_cast %86 : vector<1x8x72xf32> to vector<8x72xf32>
    %cst_56 = arith.constant dense<0.000000e+00> : vector<8x256xf32>
    %88 = tpu.matmul %87, %85, %cst_56 {dimension_numbers = #tpu.dot_dimension_numbers<[1], [0], [0], [1], [0, 0, 1, 1], [], []>, precision = #tpu.contract_precision<fp32>} : vector<8x72xf32>, vector<72x256xf32>, vector<8x256xf32> -> vector<8x256xf32>
    %c0_57 = arith.constant 0 : index
    %c0_58 = arith.constant 0 : index
    %89 = vector.load %arg4[%c0_57, %c0_58] : memref<8x256xf32, #tpu.memory_space<vmem>>, vector<8x256xf32>
    tpu.vector_store %arg4[%c0_57, %c0_58], %88 {strides = array<i32>} : memref<8x256xf32, #tpu.memory_space<vmem>>, vector<8x256xf32>,
    %cst_59 = arith.constant dense<0.000000e+00> : vector<8xf32>
    %90 = vector.multi_reduction <add>, %88, %cst_59 [1] : vector<8x256xf32> to vector<8xf32>
    %91 = vector.shape_cast %90 : vector<8xf32> to vector<8x1xf32>
    %c0_60 = arith.constant 0 : index
    %c0_61 = arith.constant 0 : index
    %92 = vector.load %arg5[%c0_60, %c0_61] : memref<8x1xf32, #tpu.memory_space<vmem>>, vector<8x1xf32>
    tpu.vector_store %arg5[%c0_60, %c0_61], %91 {strides = array<i32>} : memref<8x1xf32, #tpu.memory_space<vmem>>, vector<8x1xf32>,
    %93 = arith.mulf %88, %88 : vector<8x256xf32>
    %cst_62 = arith.constant dense<0.000000e+00> : vector<8xf32>
    %94 = vector.multi_reduction <add>, %93, %cst_62 [1] : vector<8x256xf32> to vector<8xf32>
    %95 = vector.shape_cast %94 : vector<8xf32> to vector<8x1xf32>
    %c0_63 = arith.constant 0 : index
    %c0_64 = arith.constant 0 : index
    %96 = vector.load %arg6[%c0_63, %c0_64] : memref<8x1xf32, #tpu.memory_space<vmem>>, vector<8x1xf32>
    tpu.vector_store %arg6[%c0_63, %c0_64], %95 {strides = array<i32>} : memref<8x1xf32, #tpu.memory_space<vmem>>, vector<8x1xf32>,
    return
  }
  func.func @transform_0(%arg0: i32) -> (i32, i32) {
    %c0_i32 = arith.constant 0 : i32
    %c0_i32_0 = arith.constant 0 : i32
    return %arg0, %c0_i32 : i32, i32
  }
  func.func @transform_1(%arg0: i32) -> (i32, i32, i32) {
    %c0_i32 = arith.constant 0 : i32
    %c0_i32_0 = arith.constant 0 : i32
    %c0_i32_1 = arith.constant 0 : i32
    %c0_i32_2 = arith.constant 0 : i32
    return %c0_i32, %c0_i32_0, %c0_i32_1 : i32, i32, i32
  }
  func.func @transform_2(%arg0: i32) -> (i32, i32, i32) {
    %c0_i32 = arith.constant 0 : i32
    %c0_i32_0 = arith.constant 0 : i32
    %c0_i32_1 = arith.constant 0 : i32
    %c0_i32_2 = arith.constant 0 : i32
    return %c0_i32, %c0_i32_0, %c0_i32_1 : i32, i32, i32
  }
  func.func @transform_3(%arg0: i32) -> (i32, i32) {
    %c0_i32 = arith.constant 0 : i32
    %c0_i32_0 = arith.constant 0 : i32
    return %arg0, %c0_i32 : i32, i32
  }
  func.func @transform_4(%arg0: i32) -> (i32, i32) {
    %c0_i32 = arith.constant 0 : i32
    %c0_i32_0 = arith.constant 0 : i32
    return %arg0, %c0_i32 : i32, i32
  }
  func.func @transform_5(%arg0: i32) -> (i32, i32) {
    %c0_i32 = arith.constant 0 : i32
    %c0_i32_0 = arith.constant 0 : i32
    return %arg0, %c0_i32 : i32, i32
  }
}

module attributes {stable_mosaic.version = 11 : i64} {
  func.func @_bn_apply_kernel(%arg0: i32, %arg1: memref<8x256xf32, #tpu.memory_space<vmem>>, %arg2: memref<8x2xf32, #tpu.memory_space<vmem>>, %arg3: memref<8x256xf32, #tpu.memory_space<vmem>>) attributes {dimension_semantics = [#tpu.dimension_semantics<parallel>], iteration_bounds = array<i64: 1>, scalar_prefetch = 0 : i64, scratch_operands = 0 : i64, tpu.core_type = #tpu.core_type<tc>, window_params = [{transform_indices = @transform_0, window_bounds = array<i64: 8, 256>}, {transform_indices = @transform_1, window_bounds = array<i64: 8, 2>}, {transform_indices = @transform_2, window_bounds = array<i64: 8, 256>}]} {
    %c0 = arith.constant 0 : index
    %c0_0 = arith.constant 0 : index
    %0 = vector.load %arg1[%c0, %c0_0] : memref<8x256xf32, #tpu.memory_space<vmem>>, vector<8x256xf32>
    %c0_1 = arith.constant 0 : index
    %c0_2 = arith.constant 0 : index
    %1 = vector.load %arg2[%c0_1, %c0_2] : memref<8x2xf32, #tpu.memory_space<vmem>>, vector<8x1xf32>
    %2 = vector.broadcast %1 : vector<8x1xf32> to vector<8x256xf32>
    %3 = arith.mulf %0, %2 : vector<8x256xf32>
    %c0_3 = arith.constant 0 : index
    %c1 = arith.constant 1 : index
    %4 = vector.load %arg2[%c0_3, %c1] : memref<8x2xf32, #tpu.memory_space<vmem>>, vector<8x1xf32>
    %5 = vector.broadcast %4 : vector<8x1xf32> to vector<8x256xf32>
    %6 = arith.addf %3, %5 : vector<8x256xf32>
    %c0_4 = arith.constant 0 : index
    %c0_5 = arith.constant 0 : index
    %7 = vector.load %arg3[%c0_4, %c0_5] : memref<8x256xf32, #tpu.memory_space<vmem>>, vector<8x256xf32>
    tpu.vector_store %arg3[%c0_4, %c0_5], %6 {strides = array<i32>} : memref<8x256xf32, #tpu.memory_space<vmem>>, vector<8x256xf32>,
    return
  }
  func.func @transform_0(%arg0: i32) -> (i32, i32) {
    %c0_i32 = arith.constant 0 : i32
    %c0_i32_0 = arith.constant 0 : i32
    return %arg0, %c0_i32 : i32, i32
  }
  func.func @transform_1(%arg0: i32) -> (i32, i32) {
    %c0_i32 = arith.constant 0 : i32
    %c0_i32_0 = arith.constant 0 : i32
    return %arg0, %c0_i32 : i32, i32
  }
  func.func @transform_2(%arg0: i32) -> (i32, i32) {
    %c0_i32 = arith.constant 0 : i32
    %c0_i32_0 = arith.constant 0 : i32
    return %arg0, %c0_i32 : i32, i32
  }
}

</mosaic_0001>

<llo_original>
// kernel: tile.19
$region0: #{tile.19}
  %s0 = inlined_call_operand.vmem [shape: f32[2,4], index: 0, kind: input, shape index: {}]
  %s1 = inlined_call_operand.vmem [shape: f32[8,1], index: 1, kind: output, shape index: {}]
  $region1: #{tile.19} parent=0
    #allocation0 [shape = 'u8[4096]{0}', space=vmem, size = 0x1000, scoped, tag = 'scoped mem for output reshape']
    #allocation1 [shape = 'u8[4096]{0}', space=vmem, size = 0x1000, scoped, tag = 'scoped mem for input reshape']
    %s3 = sshll.u32 1, 2
    %s4 = ssub.s32 %s3, 1
    %v5 = vld [vmem:[%s0] sm:%s4]
    %6 = vst [vmem:[#allocation1] sm:%s4] %v5
    %v7 = vld [vmem:[#allocation1] sm:$0x1]
    %vm8 = vcmask 31744
    %9 = vst.msk [vmem:[#allocation0] sm:$0x1] %vm8, %v7
    %s10 = scalar_lea.vmem [#allocation1], 1
    %v11 = vld [vmem:[%s10] sm:$0x1]
    %12 = vrot.lane.b32.xlu0 %v11, 4
    %v13 = vpop.permute.xlu0 %12
    %vm14 = vcmask 64544
    %15 = vst.msk [vmem:[#allocation0] sm:$0x1] %vm14, %v13
    %s17 = sshll.u32 1, 1
    %s18 = ssub.s32 %s17, 1
    %v20 = vld [vmem:[#allocation0] sm:%s18]
    %s21 = sshll.u32 1, 1
    %s22 = ssub.s32 %s21, 1
    %23 = vst [vmem:[%s1] sm:%s22] %v20

// kernel: tile.17
$region0: #{tile.17}
  #allocation0 [shape = 's32[1]{0}', space=sflag, size = 0x4, scoped, tag = 'scoped memory for tile.17']
  %s0 = inlined_call_operand.vmem [shape: f32[4], index: 0, kind: input, shape index: {}]
  %s1 = inlined_call_operand.vmem [shape: f32[2,4], index: 1, kind: output, shape index: {}]
  // Predicated region
  $region2: #{tile.17} parent=0 // pred_check
    _
  $region3: #{tile.17} parent=0 // pred_check_branch
    %3 = sbr.rel (0) target = $region5
  $region4: #{tile.17} parent=0 // pred_region
    _
  $region5: #{tile.17} parent=0 // pred_fallthru
    _
  %v4 = vld [vmem:[%s0] ss:$0 sm:$0xff]
  %5 = vst [vmem:[%s1] sm:$0x3] %v4

// kernel: forward.3
$region0: #{forward.3}
  #allocation0 [shape = 'u32[]', space=smem, size = 0x4, offset = 0x4, fixed_abs, tag = 'smem constant byte address 0x4 - core index']
  #allocation1 [shape = 'u32[144,128]{1,0:T(1,128)}', space=vmem, size = 0x12000, scoped, tag = 'internal scratch']
  %s0 = inlined_call_operand.vmem [shape: f32[8,256], index: 0, kind: input, shape index: {}, may-alias: {0,2}]
  %s1 = inlined_call_operand.vmem [shape: f32[8,2], index: 1, kind: input, shape index: {}]
  %s2 = inlined_call_operand.vmem [shape: f32[8,256], index: 2, kind: output, shape index: {}, may-alias: {0,2}]
  %s3 = sld [smem:[#allocation0]]
  $region18: #{forward.3} parent=0
    _
  %s5 = ssub.s32 1, %s3
  %s6 = scalar_select 0, %s5, %s3
  // Predicated region
  $region2: #{forward.3} parent=0 // pred_check
    _
  $region3: #{forward.3} parent=0 // pred_check_branch
    %8 = sbr.rel (0) target = $region5
  $region4: #{forward.3} parent=0 // pred_region
    _
  $region5: #{forward.3} parent=0 // pred_fallthru
    _
  // Predicated region
  $region6: #{forward.3} parent=0 // pred_check
    _
  $region7: #{forward.3} parent=0 // pred_check_branch
    %10 = sbr.rel (0) target = $region9
  $region8: #{forward.3} parent=0 // pred_region
    _
  $region9: #{forward.3} parent=0 // pred_fallthru
    _
  %v11 = vld [vmem:[%s0] sm:$0xff]
  %v12 = vld [vmem:[%s0 + $0x8] sm:$0xff]
  %v13 = vld [vmem:[%s1] sm:$0xff]
  %15 = vset.pattern.permute.xlu0 0
  %16 = vperm.xlu0 %15, %v13
  %v17 = vpop.permute.xlu0 %16
  %v19 = vmul.f32 %v11, %v17
  %v20 = vmul.f32 %v12, %v17
  %21 = vset.pattern.permute.xlu0 1
  %22 = vperm.xlu0 %21, %v13
  %v23 = vpop.permute.xlu0 %22
  %v25 = vadd.f32 %v19, %v23
  %v26 = vadd.f32 %v20, %v23
  %27 = vst [vmem:[%s2] sm:$0xff] %v25
  %28 = vst [vmem:[%s2 + $0x8] sm:$0xff] %v26
  // Predicated region
  $region10: #{forward.3} parent=0 // pred_check
    _
  $region11: #{forward.3} parent=0 // pred_check_branch
    %30 = sbr.rel (0) target = $region13
  $region12: #{forward.3} parent=0 // pred_region
    _
  $region13: #{forward.3} parent=0 // pred_fallthru
    _
  // Predicated region
  $region14: #{forward.3} parent=0 // pred_check
    _
  $region15: #{forward.3} parent=0 // pred_check_branch
    %32 = sbr.rel (0) target = $region17
  $region16: #{forward.3} parent=0 // pred_region
    _
  $region17: #{forward.3} parent=0 // pred_fallthru
    _

// kernel: forward.2
$region0: #{forward.2}
  #allocation0 [shape = 'u32[]', space=smem, size = 0x4, offset = 0x4, fixed_abs, tag = 'smem constant byte address 0x4 - core index']
  #allocation1 [shape = 'u32[144,128]{1,0:T(1,128)}', space=vmem, size = 0x12000, scoped, tag = 'internal scratch']
  %s0 = inlined_call_operand.vmem [shape: f32[8,256], index: 0, kind: input, shape index: {}]
  %s1 = inlined_call_operand.vmem [shape: f32[2,8,72], index: 1, kind: input, shape index: {}]
  %s2 = inlined_call_operand.vmem [shape: f32[9,1,256], index: 2, kind: input, shape index: {}]
  %s3 = inlined_call_operand.vmem [shape: f32[8,256], index: 3, kind: output, shape index: {0}]
  %s4 = inlined_call_operand.vmem [shape: f32[8,1], index: 4, kind: output, shape index: {1}]
  %s5 = inlined_call_operand.vmem [shape: f32[8,1], index: 5, kind: output, shape index: {2}]
  %6 = xla_tuple %s3, %s4, %s5
  %s7 = sld [smem:[#allocation0]]
  $region38: #{forward.2} parent=0
    _
  %s9 = ssub.s32 1, %s7
  %s10 = scalar_select 0, %s9, %s7
  // Predicated region
  $region2: #{forward.2} parent=0 // pred_check
    _
  $region3: #{forward.2} parent=0 // pred_check_branch
    %12 = sbr.rel (0) target = $region5
  $region4: #{forward.2} parent=0 // pred_region
    _
  $region5: #{forward.2} parent=0 // pred_fallthru
    _
  // Predicated region
  $region6: #{forward.2} parent=0 // pred_check
    _
  $region7: #{forward.2} parent=0 // pred_check_branch
    %14 = sbr.rel (0) target = $region9
  $region8: #{forward.2} parent=0 // pred_region
    _
  $region9: #{forward.2} parent=0 // pred_fallthru
    _
  // Predicated region
  $region10: #{forward.2} parent=0 // pred_check
    _
  $region11: #{forward.2} parent=0 // pred_check_branch
    %16 = sbr.rel (0) target = $region13
  $region12: #{forward.2} parent=0 // pred_region
    _
  $region13: #{forward.2} parent=0 // pred_fallthru
    _
  %v17 = vld [vmem:[%s0] sm:$0xff]
  %v18 = vld [vmem:[%s0 + $0x8] sm:$0xff]
  %19 = vrot.lane.b32.xlu0 %v17, 17
  %v20 = vpop.permute.xlu0 %19
  %21 = vrot.lane.b32.xlu0 %v18, 17
  %v22 = vpop.permute.xlu0 %21
  %v23 = vlaneseq
  %v24 = vand.u32 %v23, 127
  %vm25 = vcmp.lt.s32.totalorder %v24, 17
  %v26 = vsel %vm25, %v20, %v22
  %v27 = vsel %vm25, %v22, %v20
  %v28 = vld [vmem:[%s2] sm:$0x3]
  %v30 = vlaneseq
  %v31 = vshrl.u32 %v30, 7
  %v32 = vsub.s32 0, %v31
  %v33 = vrot.slane %v28, %v32
  %v34 = vlaneseq
  %v35 = vshrl.u32 %v34, 7
  %v36 = vsub.s32 1, %v35
  %v37 = vrot.slane %v28, %v36
  %v40 = vmul.f32 %v27, %v33
  %v41 = vmul.f32 %v26, %v37
  %42 = vrot.lane.b32.xlu0 %v17, 16
  %v43 = vpop.permute.xlu0 %42
  %44 = vrot.lane.b32.xlu0 %v18, 16
  %v45 = vpop.permute.xlu0 %44
  %vm46 = vcmp.lt.s32.totalorder %v24, 16
  %v47 = vsel %vm46, %v43, %v45
  %v48 = vsel %vm46, %v45, %v43
  %s49 = scalar_lea.vmem %s2, 2
  %v50 = vld [vmem:[%s49] sm:$0x3]
  %v52 = vlaneseq
  %v53 = vshrl.u32 %v52, 7
  %v54 = vsub.s32 0, %v53
  %v55 = vrot.slane %v50, %v54
  %v56 = vlaneseq
  %v57 = vshrl.u32 %v56, 7
  %v58 = vsub.s32 1, %v57
  %v59 = vrot.slane %v50, %v58
  %v62 = vmul.f32 %v48, %v55
  %v63 = vmul.f32 %v47, %v59
  %64 = vrot.lane.b32.xlu0 %v17, 15
  %v65 = vpop.permute.xlu0 %64
  %66 = vrot.lane.b32.xlu0 %v18, 15
  %v67 = vpop.permute.xlu0 %66
  %vm68 = vcmp.lt.s32.totalorder %v24, 15
  %v69 = vsel %vm68, %v65, %v67
  %v70 = vsel %vm68, %v67, %v65
  %s71 = scalar_lea.vmem %s2, 4
  %v72 = vld [vmem:[%s71] sm:$0x3]
  %v74 = vlaneseq
  %v75 = vshrl.u32 %v74, 7
  %v76 = vsub.s32 0, %v75
  %v77 = vrot.slane %v72, %v76
  %v78 = vlaneseq
  %v79 = vshrl.u32 %v78, 7
  %v80 = vsub.s32 1, %v79
  %v81 = vrot.slane %v72, %v80
  %v84 = vmul.f32 %v70, %v77
  %v85 = vmul.f32 %v69, %v81
  %86 = vrot.lane.b32.xlu0 %v17, 1
  %v87 = vpop.permute.xlu0 %86
  %88 = vrot.lane.b32.xlu0 %v18, 1
  %v89 = vpop.permute.xlu0 %88
  %vm90 = vcmp.lt.s32.totalorder %v24, 1
  %v91 = vsel %vm90, %v87, %v89
  %v92 = vsel %vm90, %v89, %v87
  %s93 = scalar_lea.vmem %s2, 6
  %v94 = vld [vmem:[%s93] sm:$0x3]
  %v96 = vlaneseq
  %v97 = vshrl.u32 %v96, 7
  %v98 = vsub.s32 0, %v97
  %v99 = vrot.slane %v94, %v98
  %v100 = vlaneseq
  %v101 = vshrl.u32 %v100, 7
  %v102 = vsub.s32 1, %v101
  %v103 = vrot.slane %v94, %v102
  %v106 = vmul.f32 %v92, %v99
  %v107 = vmul.f32 %v91, %v103
  %108 = vrot.lane.b32.xlu0 %v17, 127
  %v109 = vpop.permute.xlu0 %108
  %110 = vrot.lane.b32.xlu0 %v18, 127
  %v111 = vpop.permute.xlu0 %110
  %vm112 = vcmp.lt.s32.totalorder %v24, 127
  %v113 = vsel %vm112, %v109, %v111
  %v114 = vsel %vm112, %v111, %v109
  %s115 = scalar_lea.vmem %s2, 10
  %v116 = vld [vmem:[%s115] sm:$0x3]
  %v118 = vlaneseq
  %v119 = vshrl.u32 %v118, 7
  %v120 = vsub.s32 0, %v119
  %v121 = vrot.slane %v116, %v120
  %v122 = vlaneseq
  %v123 = vshrl.u32 %v122, 7
  %v124 = vsub.s32 1, %v123
  %v125 = vrot.slane %v116, %v124
  %v128 = vmul.f32 %v113, %v121
  %v129 = vmul.f32 %v114, %v125
  %130 = vrot.lane.b32.xlu0 %v17, 113
  %v131 = vpop.permute.xlu0 %130
  %132 = vrot.lane.b32.xlu0 %v18, 113
  %v133 = vpop.permute.xlu0 %132
  %vm134 = vcmp.lt.s32.totalorder %v24, 113
  %v135 = vsel %vm134, %v131, %v133
  %v136 = vsel %vm134, %v133, %v131
  %s137 = scalar_lea.vmem %s2, 12
  %v138 = vld [vmem:[%s137] sm:$0x3]
  %v140 = vlaneseq
  %v141 = vshrl.u32 %v140, 7
  %v142 = vsub.s32 0, %v141
  %v143 = vrot.slane %v138, %v142
  %v144 = vlaneseq
  %v145 = vshrl.u32 %v144, 7
  %v146 = vsub.s32 1, %v145
  %v147 = vrot.slane %v138, %v146
  %v150 = vmul.f32 %v135, %v143
  %v151 = vmul.f32 %v136, %v147
  %152 = vrot.lane.b32.xlu0 %v17, 112
  %v153 = vpop.permute.xlu0 %152
  %154 = vrot.lane.b32.xlu0 %v18, 112
  %v155 = vpop.permute.xlu0 %154
  %vm156 = vcmp.lt.s32.totalorder %v24, 112
  %v157 = vsel %vm156, %v153, %v155
  %v158 = vsel %vm156, %v155, %v153
  %s159 = scalar_lea.vmem %s2, 14
  %v160 = vld [vmem:[%s159] sm:$0x3]
  %v162 = vlaneseq
  %v163 = vshrl.u32 %v162, 7
  %v164 = vsub.s32 0, %v163
  %v165 = vrot.slane %v160, %v164
  %v166 = vlaneseq
  %v167 = vshrl.u32 %v166, 7
  %v168 = vsub.s32 1, %v167
  %v169 = vrot.slane %v160, %v168
  %v172 = vmul.f32 %v157, %v165
  %v173 = vmul.f32 %v158, %v169
  %174 = vrot.lane.b32.xlu0 %v17, 111
  %v175 = vpop.permute.xlu0 %174
  %176 = vrot.lane.b32.xlu0 %v18, 111
  %v177 = vpop.permute.xlu0 %176
  %vm178 = vcmp.lt.s32.totalorder %v24, 111
  %v179 = vsel %vm178, %v175, %v177
  %v180 = vsel %vm178, %v177, %v175
  %s181 = scalar_lea.vmem %s2, 16
  %v182 = vld [vmem:[%s181] sm:$0x3]
  %v184 = vlaneseq
  %v185 = vshrl.u32 %v184, 7
  %v186 = vsub.s32 0, %v185
  %v187 = vrot.slane %v182, %v186
  %v188 = vlaneseq
  %v189 = vshrl.u32 %v188, 7
  %v190 = vsub.s32 1, %v189
  %v191 = vrot.slane %v182, %v190
  %v194 = vmul.f32 %v179, %v187
  %v195 = vmul.f32 %v180, %v191
  %v196 = vld [vmem:[%s1] sm:$0xff]
  %vm197 = vcmask 588800
  %v199 = vsel %vm197, %v196, 0
  %201 = vmatprep.subr.mxu0 0.0
  %202 = vmatpush1.msra.mxu0 0.0
  %203 = vmatprep.subr.mxu0 0.0
  %204 = vmatpush1.msra.mxu0 0.0
  %205 = vmatprep.subr.mxu0 0.0
  %206 = vmatpush1.msra.mxu0 0.0
  %207 = vmatprep.subr.mxu0 0.0
  %208 = vmatpush1.msra.mxu0 0.0
  %209 = vmatprep.subr.mxu0 0.0
  %210 = vmatpush1.msra.mxu0 0.0
  %211 = vmatprep.subr.mxu0 0.0
  %212 = vmatpush1.msra.mxu0 0.0
  %213 = vmatprep.subr.mxu0 0.0
  %214 = vmatpush1.msra.mxu0 0.0
  %v215 = vand.u32 %v195, 4294901760
  %216 = vmatprep.subr.mxu0 %v215
  %v217 = vand.u32 %v194, 4294901760
  %218 = vmatpush1.msra.mxu0 %v217
  %v219 = vand.u32 %v173, 4294901760
  %220 = vmatprep.subr.mxu0 %v219
  %v221 = vand.u32 %v172, 4294901760
  %222 = vmatpush1.msra.mxu0 %v221
  %v223 = vand.u32 %v151, 4294901760
  %224 = vmatprep.subr.mxu0 %v223
  %v225 = vand.u32 %v150, 4294901760
  %226 = vmatpush1.msra.mxu0 %v225
  %v227 = vand.u32 %v129, 4294901760
  %228 = vmatprep.subr.mxu0 %v227
  %v229 = vand.u32 %v128, 4294901760
  %230 = vmatpush1.msra.mxu0 %v229
  %v231 = vand.u32 %v18, 4294901760
  %232 = vmatprep.subr.mxu0 %v231
  %v233 = vand.u32 %v17, 4294901760
  %234 = vmatpush1.msra.mxu0 %v233
  %v235 = vand.u32 %v107, 4294901760
  %236 = vmatprep.subr.mxu0 %v235
  %v237 = vand.u32 %v106, 4294901760
  %238 = vmatpush1.msra.mxu0 %v237
  %v239 = vand.u32 %v85, 4294901760
  %240 = vmatprep.subr.mxu0 %v239
  %v241 = vand.u32 %v84, 4294901760
  %242 = vmatpush1.msra.mxu0 %v241
  %v243 = vand.u32 %v63, 4294901760
  %244 = vmatprep.subr.mxu0 %v243
  %v245 = vand.u32 %v62, 4294901760
  %246 = vmatpush1.msra.mxu0 %v245
  %v247 = vand.u32 %v41, 4294901760
  %248 = vmatprep.subr.mxu0 %v247
  %v249 = vand.u32 %v40, 4294901760
  %250 = vmatpush1.msra.mxu0 %v249
  %251 = vmatprep.subr.mxu0 0.0
  %252 = vmatpush2.msra.mxu0 0.0
  %253 = vmatprep.subr.mxu0 0.0
  %254 = vmatpush2.msra.mxu0 0.0
  %255 = vmatprep.subr.mxu0 0.0
  %256 = vmatpush2.msra.mxu0 0.0
  %257 = vmatprep.subr.mxu0 0.0
  %258 = vmatpush2.msra.mxu0 0.0
  %259 = vmatprep.subr.mxu0 0.0
  %260 = vmatpush2.msra.mxu0 0.0
  %261 = vmatprep.subr.mxu0 0.0
  %262 = vmatpush2.msra.mxu0 0.0
  %263 = vmatprep.subr.mxu0 0.0
  %264 = vmatpush2.msra.mxu0 0.0
  %265 = vmatprep.subr.mxu0 0.0
  %266 = vmatpush2.msra.mxu0 0.0
  %267 = vmatprep.subr.mxu0 0.0
  %268 = vmatpush2.msra.mxu0 0.0
  %269 = vmatprep.subr.mxu0 0.0
  %270 = vmatpush2.msra.mxu0 0.0
  %271 = vmatprep.subr.mxu0 0.0
  %272 = vmatpush2.msra.mxu0 0.0
  %273 = vmatprep.subr.mxu0 0.0
  %274 = vmatpush2.msra.mxu0 0.0
  %275 = vmatprep.subr.mxu0 0.0
  %276 = vmatpush2.msra.mxu0 0.0
  %277 = vmatprep.subr.mxu0 0.0
  %278 = vmatpush2.msra.mxu0 0.0
  %279 = vmatprep.subr.mxu0 0.0
  %280 = vmatpush2.msra.mxu0 0.0
  %281 = vmatprep.subr.mxu0 0.0
  %282 = vmatpush2.msra.mxu0 0.0
  %283 = vmatprep.mubr.f32.mxu0 0.0
  %v284 = vand.u32 %v199, 4294901760
  %v285 = vsub.f32 %v199, %v284
  %v286 = vand.u32 %v285, 4294901760
  %v287 = vsub.f32 %v285, %v286
  %v288 = vand.u32 %v287, 4294901760
  %289 = vmatmul.mubr.f32.gmra.mxu0 %v288
  %v290 = vpop.f32.mrf.mxu0
  %v291 = vadd.f32 0.0, %v290
  %v292 = vpop.f32.mrf.mxu0
  %v293 = vadd.f32 0.0, %v292
  %294 = vdwg.mxu0
  %295 = vmatprep.subr.mxu0 0.0
  %296 = vmatpush1.msra.mxu0 0.0
  %297 = vmatprep.subr.mxu0 0.0
  %298 = vmatpush1.msra.mxu0 0.0
  %299 = vmatprep.subr.mxu0 0.0
  %300 = vmatpush1.msra.mxu0 0.0
  %301 = vmatprep.subr.mxu0 0.0
  %302 = vmatpush1.msra.mxu0 0.0
  %303 = vmatprep.subr.mxu0 0.0
  %304 = vmatpush1.msra.mxu0 0.0
  %305 = vmatprep.subr.mxu0 0.0
  %306 = vmatpush1.msra.mxu0 0.0
  %307 = vmatprep.subr.mxu0 0.0
  %308 = vmatpush1.msra.mxu0 0.0
  %v309 = vand.u32 %v195, 4294901760
  %v310 = vsub.f32 %v195, %v309
  %v311 = vand.u32 %v310, 4294901760
  %v312 = vsub.f32 %v310, %v311
  %v313 = vand.u32 %v312, 4294901760
  %314 = vmatprep.subr.mxu0 %v313
  %v315 = vand.u32 %v194, 4294901760
  %v316 = vsub.f32 %v194, %v315
  %v317 = vand.u32 %v316, 4294901760
  %v318 = vsub.f32 %v316, %v317
  %v319 = vand.u32 %v318, 4294901760
  %320 = vmatpush1.msra.mxu0 %v319
  %v321 = vand.u32 %v173, 4294901760
  %v322 = vsub.f32 %v173, %v321
  %v323 = vand.u32 %v322, 4294901760
  %v324 = vsub.f32 %v322, %v323
  %v325 = vand.u32 %v324, 4294901760
  %326 = vmatprep.subr.mxu0 %v325
  %v327 = vand.u32 %v172, 4294901760
  %v328 = vsub.f32 %v172, %v327
  %v329 = vand.u32 %v328, 4294901760
  %v330 = vsub.f32 %v328, %v329
  %v331 = vand.u32 %v330, 4294901760
  %332 = vmatpush1.msra.mxu0 %v331
  %v333 = vand.u32 %v151, 4294901760
  %v334 = vsub.f32 %v151, %v333
  %v335 = vand.u32 %v334, 4294901760
  %v336 = vsub.f32 %v334, %v335
  %v337 = vand.u32 %v336, 4294901760
  %338 = vmatprep.subr.mxu0 %v337
  %v339 = vand.u32 %v150, 4294901760
  %v340 = vsub.f32 %v150, %v339
  %v341 = vand.u32 %v340, 4294901760
  %v342 = vsub.f32 %v340, %v341
  %v343 = vand.u32 %v342, 4294901760
  %344 = vmatpush1.msra.mxu0 %v343
  %v345 = vand.u32 %v129, 4294901760
  %v346 = vsub.f32 %v129, %v345
  %v347 = vand.u32 %v346, 4294901760
  %v348 = vsub.f32 %v346, %v347
  %v349 = vand.u32 %v348, 4294901760
  %350 = vmatprep.subr.mxu0 %v349
  %v351 = vand.u32 %v128, 4294901760
  %v352 = vsub.f32 %v128, %v351
  %v353 = vand.u32 %v352, 4294901760
  %v354 = vsub.f32 %v352, %v353
  %v355 = vand.u32 %v354, 4294901760
  %356 = vmatpush1.msra.mxu0 %v355
  %v357 = vand.u32 %v18, 4294901760
  %v358 = vsub.f32 %v18, %v357
  %v359 = vand.u32 %v358, 4294901760
  %v360 = vsub.f32 %v358, %v359
  %v361 = vand.u32 %v360, 4294901760
  %362 = vmatprep.subr.mxu0 %v361
  %v363 = vand.u32 %v17, 4294901760
  %v364 = vsub.f32 %v17, %v363
  %v365 = vand.u32 %v364, 4294901760
  %v366 = vsub.f32 %v364, %v365
  %v367 = vand.u32 %v366, 4294901760
  %368 = vmatpush1.msra.mxu0 %v367
  %v369 = vand.u32 %v107, 4294901760
  %v370 = vsub.f32 %v107, %v369
  %v371 = vand.u32 %v370, 4294901760
  %v372 = vsub.f32 %v370, %v371
  %v373 = vand.u32 %v372, 4294901760
  %374 = vmatprep.subr.mxu0 %v373
  %v375 = vand.u32 %v106, 4294901760
  %v376 = vsub.f32 %v106, %v375
  %v377 = vand.u32 %v376, 4294901760
  %v378 = vsub.f32 %v376, %v377
  %v379 = vand.u32 %v378, 4294901760
  %380 = vmatpush1.msra.mxu0 %v379
  %v381 = vand.u32 %v85, 4294901760
  %v382 = vsub.f32 %v85, %v381
  %v383 = vand.u32 %v382, 4294901760
  %v384 = vsub.f32 %v382, %v383
  %v385 = vand.u32 %v384, 4294901760
  %386 = vmatprep.subr.mxu0 %v385
  %v387 = vand.u32 %v84, 4294901760
  %v388 = vsub.f32 %v84, %v387
  %v389 = vand.u32 %v388, 4294901760
  %v390 = vsub.f32 %v388, %v389
  %v391 = vand.u32 %v390, 4294901760
  %392 = vmatpush1.msra.mxu0 %v391
  %v393 = vand.u32 %v63, 4294901760
  %v394 = vsub.f32 %v63, %v393
  %v395 = vand.u32 %v394, 4294901760
  %v396 = vsub.f32 %v394, %v395
  %v397 = vand.u32 %v396, 4294901760
  %398 = vmatprep.subr.mxu0 %v397
  %v399 = vand.u32 %v62, 4294901760
  %v400 = vsub.f32 %v62, %v399
  %v401 = vand.u32 %v400, 4294901760
  %v402 = vsub.f32 %v400, %v401
  %v403 = vand.u32 %v402, 4294901760
  %404 = vmatpush1.msra.mxu0 %v403
  %v405 = vand.u32 %v41, 4294901760
  %v406 = vsub.f32 %v41, %v405
  %v407 = vand.u32 %v406, 4294901760
  %v408 = vsub.f32 %v406, %v407
  %v409 = vand.u32 %v408, 4294901760
  %410 = vmatprep.subr.mxu0 %v409
  %v411 = vand.u32 %v40, 4294901760
  %v412 = vsub.f32 %v40, %v411
  %v413 = vand.u32 %v412, 4294901760
  %v414 = vsub.f32 %v412, %v413
  %v415 = vand.u32 %v414, 4294901760
  %416 = vmatpush1.msra.mxu0 %v415
  %417 = vmatprep.subr.mxu0 0.0
  %418 = vmatpush2.msra.mxu0 0.0
  %419 = vmatprep.subr.mxu0 0.0
  %420 = vmatpush2.msra.mxu0 0.0
  %421 = vmatprep.subr.mxu0 0.0
  %422 = vmatpush2.msra.mxu0 0.0
  %423 = vmatprep.subr.mxu0 0.0
  %424 = vmatpush2.msra.mxu0 0.0
  %425 = vmatprep.subr.mxu0 0.0
  %426 = vmatpush2.msra.mxu0 0.0
  %427 = vmatprep.subr.mxu0 0.0
  %428 = vmatpush2.msra.mxu0 0.0
  %429 = vmatprep.subr.mxu0 0.0
  %430 = vmatpush2.msra.mxu0 0.0
  %431 = vmatprep.subr.mxu0 0.0
  %432 = vmatpush2.msra.mxu0 0.0
  %433 = vmatprep.subr.mxu0 0.0
  %434 = vmatpush2.msra.mxu0 0.0
  %435 = vmatprep.subr.mxu0 0.0
  %436 = vmatpush2.msra.mxu0 0.0
  %437 = vmatprep.subr.mxu0 0.0
  %438 = vmatpush2.msra.mxu0 0.0
  %439 = vmatprep.subr.mxu0 0.0
  %440 = vmatpush2.msra.mxu0 0.0
  %441 = vmatprep.subr.mxu0 0.0
  %442 = vmatpush2.msra.mxu0 0.0
  %443 = vmatprep.subr.mxu0 0.0
  %444 = vmatpush2.msra.mxu0 0.0
  %445 = vmatprep.subr.mxu0 0.0
  %446 = vmatpush2.msra.mxu0 0.0
  %447 = vmatprep.subr.mxu0 0.0
  %448 = vmatpush2.msra.mxu0 0.0
  %449 = vmatprep.mubr.f32.mxu0 0.0
  %v450 = vand.u32 %v199, 4294901760
  %451 = vmatmul.mubr.f32.gmra.mxu0 %v450
  %v452 = vpop.f32.mrf.mxu0
  %v453 = vadd.f32 %v291, %v452
  %v454 = vpop.f32.mrf.mxu0
  %v455 = vadd.f32 %v293, %v454
  %456 = vdwg.mxu0
  %457 = vmatprep.subr.mxu0 0.0
  %458 = vmatpush1.msra.mxu0 0.0
  %459 = vmatprep.subr.mxu0 0.0
  %460 = vmatpush1.msra.mxu0 0.0
  %461 = vmatprep.subr.mxu0 0.0
  %462 = vmatpush1.msra.mxu0 0.0
  %463 = vmatprep.subr.mxu0 0.0
  %464 = vmatpush1.msra.mxu0 0.0
  %465 = vmatprep.subr.mxu0 0.0
  %466 = vmatpush1.msra.mxu0 0.0
  %467 = vmatprep.subr.mxu0 0.0
  %468 = vmatpush1.msra.mxu0 0.0
  %469 = vmatprep.subr.mxu0 0.0
  %470 = vmatpush1.msra.mxu0 0.0
  %v471 = vand.u32 %v195, 4294901760
  %v472 = vsub.f32 %v195, %v471
  %473 = vmatprep.subr.mxu0 %v472
  %v474 = vand.u32 %v194, 4294901760
  %v475 = vsub.f32 %v194, %v474
  %476 = vmatpush1.msra.mxu0 %v475
  %v477 = vand.u32 %v173, 4294901760
  %v478 = vsub.f32 %v173, %v477
  %479 = vmatprep.subr.mxu0 %v478
  %v480 = vand.u32 %v172, 4294901760
  %v481 = vsub.f32 %v172, %v480
  %482 = vmatpush1.msra.mxu0 %v481
  %v483 = vand.u32 %v151, 4294901760
  %v484 = vsub.f32 %v151, %v483
  %485 = vmatprep.subr.mxu0 %v484
  %v486 = vand.u32 %v150, 4294901760
  %v487 = vsub.f32 %v150, %v486
  %488 = vmatpush1.msra.mxu0 %v487
  %v489 = vand.u32 %v129, 4294901760
  %v490 = vsub.f32 %v129, %v489
  %491 = vmatprep.subr.mxu0 %v490
  %v492 = vand.u32 %v128, 4294901760
  %v493 = vsub.f32 %v128, %v492
  %494 = vmatpush1.msra.mxu0 %v493
  %v495 = vand.u32 %v18, 4294901760
  %v496 = vsub.f32 %v18, %v495
  %497 = vmatprep.subr.mxu0 %v496
  %v498 = vand.u32 %v17, 4294901760
  %v499 = vsub.f32 %v17, %v498
  %500 = vmatpush1.msra.mxu0 %v499
  %v501 = vand.u32 %v107, 4294901760
  %v502 = vsub.f32 %v107, %v501
  %503 = vmatprep.subr.mxu0 %v502
  %v504 = vand.u32 %v106, 4294901760
  %v505 = vsub.f32 %v106, %v504
  %506 = vmatpush1.msra.mxu0 %v505
  %v507 = vand.u32 %v85, 4294901760
  %v508 = vsub.f32 %v85, %v507
  %509 = vmatprep.subr.mxu0 %v508
  %v510 = vand.u32 %v84, 4294901760
  %v511 = vsub.f32 %v84, %v510
  %512 = vmatpush1.msra.mxu0 %v511
  %v513 = vand.u32 %v63, 4294901760
  %v514 = vsub.f32 %v63, %v513
  %515 = vmatprep.subr.mxu0 %v514
  %v516 = vand.u32 %v62, 4294901760
  %v517 = vsub.f32 %v62, %v516
  %518 = vmatpush1.msra.mxu0 %v517
  %v519 = vand.u32 %v41, 4294901760
  %v520 = vsub.f32 %v41, %v519
  %521 = vmatprep.subr.mxu0 %v520
  %v522 = vand.u32 %v40, 4294901760
  %v523 = vsub.f32 %v40, %v522
  %524 = vmatpush1.msra.mxu0 %v523
  %525 = vmatprep.subr.mxu0 0.0
  %526 = vmatpush2.msra.mxu0 0.0
  %527 = vmatprep.subr.mxu0 0.0
  %528 = vmatpush2.msra.mxu0 0.0
  %529 = vmatprep.subr.mxu0 0.0
  %530 = vmatpush2.msra.mxu0 0.0
  %531 = vmatprep.subr.mxu0 0.0
  %532 = vmatpush2.msra.mxu0 0.0
  %533 = vmatprep.subr.mxu0 0.0
  %534 = vmatpush2.msra.mxu0 0.0
  %535 = vmatprep.subr.mxu0 0.0
  %536 = vmatpush2.msra.mxu0 0.0
  %537 = vmatprep.subr.mxu0 0.0
  %538 = vmatpush2.msra.mxu0 0.0
  %539 = vmatprep.subr.mxu0 0.0
  %540 = vmatpush2.msra.mxu0 0.0
  %541 = vmatprep.subr.mxu0 0.0
  %542 = vmatpush2.msra.mxu0 0.0
  %543 = vmatprep.subr.mxu0 0.0
  %544 = vmatpush2.msra.mxu0 0.0
  %545 = vmatprep.subr.mxu0 0.0
  %546 = vmatpush2.msra.mxu0 0.0
  %547 = vmatprep.subr.mxu0 0.0
  %548 = vmatpush2.msra.mxu0 0.0
  %549 = vmatprep.subr.mxu0 0.0
  %550 = vmatpush2.msra.mxu0 0.0
  %551 = vmatprep.subr.mxu0 0.0
  %552 = vmatpush2.msra.mxu0 0.0
  %553 = vmatprep.subr.mxu0 0.0
  %554 = vmatpush2.msra.mxu0 0.0
  %555 = vmatprep.subr.mxu0 0.0
  %556 = vmatpush2.msra.mxu0 0.0
  %557 = vmatprep.mubr.f32.mxu0 0.0
  %v558 = vand.u32 %v199, 4294901760
  %v559 = vsub.f32 %v199, %v558
  %560 = vmatmul.mubr.f32.gmra.mxu0 %v559
  %v561 = vpop.f32.mrf.mxu0
  %v562 = vadd.f32 %v453, %v561
  %v563 = vpop.f32.mrf.mxu0
  %v564 = vadd.f32 %v455, %v563
  %565 = vdwg.mxu0
  %566 = vmatprep.subr.mxu0 0.0
  %567 = vmatpush1.msra.mxu0 0.0
  %568 = vmatprep.subr.mxu0 0.0
  %569 = vmatpush1.msra.mxu0 0.0
  %570 = vmatprep.subr.mxu0 0.0
  %571 = vmatpush1.msra.mxu0 0.0
  %572 = vmatprep.subr.mxu0 0.0
  %573 = vmatpush1.msra.mxu0 0.0
  %574 = vmatprep.subr.mxu0 0.0
  %575 = vmatpush1.msra.mxu0 0.0
  %576 = vmatprep.subr.mxu0 0.0
  %577 = vmatpush1.msra.mxu0 0.0
  %578 = vmatprep.subr.mxu0 0.0
  %579 = vmatpush1.msra.mxu0 0.0
  %v580 = vand.u32 %v195, 4294901760
  %581 = vmatprep.subr.mxu0 %v580
  %v582 = vand.u32 %v194, 4294901760
  %583 = vmatpush1.msra.mxu0 %v582
  %v584 = vand.u32 %v173, 4294901760
  %585 = vmatprep.subr.mxu0 %v584
  %v586 = vand.u32 %v172, 4294901760
  %587 = vmatpush1.msra.mxu0 %v586
  %v588 = vand.u32 %v151, 4294901760
  %589 = vmatprep.subr.mxu0 %v588
  %v590 = vand.u32 %v150, 4294901760
  %591 = vmatpush1.msra.mxu0 %v590
  %v592 = vand.u32 %v129, 4294901760
  %593 = vmatprep.subr.mxu0 %v592
  %v594 = vand.u32 %v128, 4294901760
  %595 = vmatpush1.msra.mxu0 %v594
  %v596 = vand.u32 %v18, 4294901760
  %597 = vmatprep.subr.mxu0 %v596
  %v598 = vand.u32 %v17, 4294901760
  %599 = vmatpush1.msra.mxu0 %v598
  %v600 = vand.u32 %v107, 4294901760
  %601 = vmatprep.subr.mxu0 %v600
  %v602 = vand.u32 %v106, 4294901760
  %603 = vmatpush1.msra.mxu0 %v602
  %v604 = vand.u32 %v85, 4294901760
  %605 = vmatprep.subr.mxu0 %v604
  %v606 = vand.u32 %v84, 4294901760
  %607 = vmatpush1.msra.mxu0 %v606
  %v608 = vand.u32 %v63, 4294901760
  %609 = vmatprep.subr.mxu0 %v608
  %v610 = vand.u32 %v62, 4294901760
  %611 = vmatpush1.msra.mxu0 %v610
  %v612 = vand.u32 %v41, 4294901760
  %613 = vmatprep.subr.mxu0 %v612
  %v614 = vand.u32 %v40, 4294901760
  %615 = vmatpush1.msra.mxu0 %v614
  %616 = vmatprep.subr.mxu0 0.0
  %617 = vmatpush2.msra.mxu0 0.0
  %618 = vmatprep.subr.mxu0 0.0
  %619 = vmatpush2.msra.mxu0 0.0
  %620 = vmatprep.subr.mxu0 0.0
  %621 = vmatpush2.msra.mxu0 0.0
  %622 = vmatprep.subr.mxu0 0.0
  %623 = vmatpush2.msra.mxu0 0.0
  %624 = vmatprep.subr.mxu0 0.0
  %625 = vmatpush2.msra.mxu0 0.0
  %626 = vmatprep.subr.mxu0 0.0
  %627 = vmatpush2.msra.mxu0 0.0
  %628 = vmatprep.subr.mxu0 0.0
  %629 = vmatpush2.msra.mxu0 0.0
  %630 = vmatprep.subr.mxu0 0.0
  %631 = vmatpush2.msra.mxu0 0.0
  %632 = vmatprep.subr.mxu0 0.0
  %633 = vmatpush2.msra.mxu0 0.0
  %634 = vmatprep.subr.mxu0 0.0
  %635 = vmatpush2.msra.mxu0 0.0
  %636 = vmatprep.subr.mxu0 0.0
  %637 = vmatpush2.msra.mxu0 0.0
  %638 = vmatprep.subr.mxu0 0.0
  %639 = vmatpush2.msra.mxu0 0.0
  %640 = vmatprep.subr.mxu0 0.0
  %641 = vmatpush2.msra.mxu0 0.0
  %642 = vmatprep.subr.mxu0 0.0
  %643 = vmatpush2.msra.mxu0 0.0
  %644 = vmatprep.subr.mxu0 0.0
  %645 = vmatpush2.msra.mxu0 0.0
  %646 = vmatprep.subr.mxu0 0.0
  %647 = vmatpush2.msra.mxu0 0.0
  %648 = vmatprep.mubr.f32.mxu0 0.0
  %v649 = vand.u32 %v199, 4294901760
  %v650 = vsub.f32 %v199, %v649
  %v651 = vand.u32 %v650, 4294901760
  %652 = vmatmul.mubr.f32.gmra.mxu0 %v651
  %v653 = vpop.f32.mrf.mxu0
  %v654 = vadd.f32 %v562, %v653
  %v655 = vpop.f32.mrf.mxu0
  %v656 = vadd.f32 %v564, %v655
  %657 = vdwg.mxu0
  %658 = vmatprep.subr.mxu0 0.0
  %659 = vmatpush1.msra.mxu0 0.0
  %660 = vmatprep.subr.mxu0 0.0
  %661 = vmatpush1.msra.mxu0 0.0
  %662 = vmatprep.subr.mxu0 0.0
  %663 = vmatpush1.msra.mxu0 0.0
  %664 = vmatprep.subr.mxu0 0.0
  %665 = vmatpush1.msra.mxu0 0.0
  %666 = vmatprep.subr.mxu0 0.0
  %667 = vmatpush1.msra.mxu0 0.0
  %668 = vmatprep.subr.mxu0 0.0
  %669 = vmatpush1.msra.mxu0 0.0
  %670 = vmatprep.subr.mxu0 0.0
  %671 = vmatpush1.msra.mxu0 0.0
  %v672 = vand.u32 %v195, 4294901760
  %v673 = vsub.f32 %v195, %v672
  %v674 = vand.u32 %v673, 4294901760
  %675 = vmatprep.subr.mxu0 %v674
  %v676 = vand.u32 %v194, 4294901760
  %v677 = vsub.f32 %v194, %v676
  %v678 = vand.u32 %v677, 4294901760
  %679 = vmatpush1.msra.mxu0 %v678
  %v680 = vand.u32 %v173, 4294901760
  %v681 = vsub.f32 %v173, %v680
  %v682 = vand.u32 %v681, 4294901760
  %683 = vmatprep.subr.mxu0 %v682
  %v684 = vand.u32 %v172, 4294901760
  %v685 = vsub.f32 %v172, %v684
  %v686 = vand.u32 %v685, 4294901760
  %687 = vmatpush1.msra.mxu0 %v686
  %v688 = vand.u32 %v151, 4294901760
  %v689 = vsub.f32 %v151, %v688
  %v690 = vand.u32 %v689, 4294901760
  %691 = vmatprep.subr.mxu0 %v690
  %v692 = vand.u32 %v150, 4294901760
  %v693 = vsub.f32 %v150, %v692
  %v694 = vand.u32 %v693, 4294901760
  %695 = vmatpush1.msra.mxu0 %v694
  %v696 = vand.u32 %v129, 4294901760
  %v697 = vsub.f32 %v129, %v696
  %v698 = vand.u32 %v697, 4294901760
  %699 = vmatprep.subr.mxu0 %v698
  %v700 = vand.u32 %v128, 4294901760
  %v701 = vsub.f32 %v128, %v700
  %v702 = vand.u32 %v701, 4294901760
  %703 = vmatpush1.msra.mxu0 %v702
  %v704 = vand.u32 %v18, 4294901760
  %v705 = vsub.f32 %v18, %v704
  %v706 = vand.u32 %v705, 4294901760
  %707 = vmatprep.subr.mxu0 %v706
  %v708 = vand.u32 %v17, 4294901760
  %v709 = vsub.f32 %v17, %v708
  %v710 = vand.u32 %v709, 4294901760
  %711 = vmatpush1.msra.mxu0 %v710
  %v712 = vand.u32 %v107, 4294901760
  %v713 = vsub.f32 %v107, %v712
  %v714 = vand.u32 %v713, 4294901760
  %715 = vmatprep.subr.mxu0 %v714
  %v716 = vand.u32 %v106, 4294901760
  %v717 = vsub.f32 %v106, %v716
  %v718 = vand.u32 %v717, 4294901760
  %719 = vmatpush1.msra.mxu0 %v718
  %v720 = vand.u32 %v85, 4294901760
  %v721 = vsub.f32 %v85, %v720
  %v722 = vand.u32 %v721, 4294901760
  %723 = vmatprep.subr.mxu0 %v722
  %v724 = vand.u32 %v84, 4294901760
  %v725 = vsub.f32 %v84, %v724
  %v726 = vand.u32 %v725, 4294901760
  %727 = vmatpush1.msra.mxu0 %v726
  %v728 = vand.u32 %v63, 4294901760
  %v729 = vsub.f32 %v63, %v728
  %v730 = vand.u32 %v729, 4294901760
  %731 = vmatprep.subr.mxu0 %v730
  %v732 = vand.u32 %v62, 4294901760
  %v733 = vsub.f32 %v62, %v732
  %v734 = vand.u32 %v733, 4294901760
  %735 = vmatpush1.msra.mxu0 %v734
  %v736 = vand.u32 %v41, 4294901760
  %v737 = vsub.f32 %v41, %v736
  %v738 = vand.u32 %v737, 4294901760
  %739 = vmatprep.subr.mxu0 %v738
  %v740 = vand.u32 %v40, 4294901760
  %v741 = vsub.f32 %v40, %v740
  %v742 = vand.u32 %v741, 4294901760
  %743 = vmatpush1.msra.mxu0 %v742
  %744 = vmatprep.subr.mxu0 0.0
  %745 = vmatpush2.msra.mxu0 0.0
  %746 = vmatprep.subr.mxu0 0.0
  %747 = vmatpush2.msra.mxu0 0.0
  %748 = vmatprep.subr.mxu0 0.0
  %749 = vmatpush2.msra.mxu0 0.0
  %750 = vmatprep.subr.mxu0 0.0
  %751 = vmatpush2.msra.mxu0 0.0
  %752 = vmatprep.subr.mxu0 0.0
  %753 = vmatpush2.msra.mxu0 0.0
  %754 = vmatprep.subr.mxu0 0.0
  %755 = vmatpush2.msra.mxu0 0.0
  %756 = vmatprep.subr.mxu0 0.0
  %757 = vmatpush2.msra.mxu0 0.0
  %758 = vmatprep.subr.mxu0 0.0
  %759 = vmatpush2.msra.mxu0 0.0
  %760 = vmatprep.subr.mxu0 0.0
  %761 = vmatpush2.msra.mxu0 0.0
  %762 = vmatprep.subr.mxu0 0.0
  %763 = vmatpush2.msra.mxu0 0.0
  %764 = vmatprep.subr.mxu0 0.0
  %765 = vmatpush2.msra.mxu0 0.0
  %766 = vmatprep.subr.mxu0 0.0
  %767 = vmatpush2.msra.mxu0 0.0
  %768 = vmatprep.subr.mxu0 0.0
  %769 = vmatpush2.msra.mxu0 0.0
  %770 = vmatprep.subr.mxu0 0.0
  %771 = vmatpush2.msra.mxu0 0.0
  %772 = vmatprep.subr.mxu0 0.0
  %773 = vmatpush2.msra.mxu0 0.0
  %774 = vmatprep.subr.mxu0 0.0
  %775 = vmatpush2.msra.mxu0 0.0
  %776 = vmatprep.mubr.f32.mxu0 0.0
  %v777 = vand.u32 %v199, 4294901760
  %778 = vmatmul.mubr.f32.gmra.mxu0 %v777
  %v779 = vpop.f32.mrf.mxu0
  %v780 = vadd.f32 %v654, %v779
  %v781 = vpop.f32.mrf.mxu0
  %v782 = vadd.f32 %v656, %v781
  %783 = vdwg.mxu0
  %784 = vmatprep.subr.mxu0 0.0
  %785 = vmatpush1.msra.mxu0 0.0
  %786 = vmatprep.subr.mxu0 0.0
  %787 = vmatpush1.msra.mxu0 0.0
  %788 = vmatprep.subr.mxu0 0.0
  %789 = vmatpush1.msra.mxu0 0.0
  %790 = vmatprep.subr.mxu0 0.0
  %791 = vmatpush1.msra.mxu0 0.0
  %792 = vmatprep.subr.mxu0 0.0
  %793 = vmatpush1.msra.mxu0 0.0
  %794 = vmatprep.subr.mxu0 0.0
  %795 = vmatpush1.msra.mxu0 0.0
  %796 = vmatprep.subr.mxu0 0.0
  %797 = vmatpush1.msra.mxu0 0.0
  %v798 = vand.u32 %v195, 4294901760
  %799 = vmatprep.subr.mxu0 %v798
  %v800 = vand.u32 %v194, 4294901760
  %801 = vmatpush1.msra.mxu0 %v800
  %v802 = vand.u32 %v173, 4294901760
  %803 = vmatprep.subr.mxu0 %v802
  %v804 = vand.u32 %v172, 4294901760
  %805 = vmatpush1.msra.mxu0 %v804
  %v806 = vand.u32 %v151, 4294901760
  %807 = vmatprep.subr.mxu0 %v806
  %v808 = vand.u32 %v150, 4294901760
  %809 = vmatpush1.msra.mxu0 %v808
  %v810 = vand.u32 %v129, 4294901760
  %811 = vmatprep.subr.mxu0 %v810
  %v812 = vand.u32 %v128, 4294901760
  %813 = vmatpush1.msra.mxu0 %v812
  %v814 = vand.u32 %v18, 4294901760
  %815 = vmatprep.subr.mxu0 %v814
  %v816 = vand.u32 %v17, 4294901760
  %817 = vmatpush1.msra.mxu0 %v816
  %v818 = vand.u32 %v107, 4294901760
  %819 = vmatprep.subr.mxu0 %v818
  %v820 = vand.u32 %v106, 4294901760
  %821 = vmatpush1.msra.mxu0 %v820
  %v822 = vand.u32 %v85, 4294901760
  %823 = vmatprep.subr.mxu0 %v822
  %v824 = vand.u32 %v84, 4294901760
  %825 = vmatpush1.msra.mxu0 %v824
  %v826 = vand.u32 %v63, 4294901760
  %827 = vmatprep.subr.mxu0 %v826
  %v828 = vand.u32 %v62, 4294901760
  %829 = vmatpush1.msra.mxu0 %v828
  %v830 = vand.u32 %v41, 4294901760
  %831 = vmatprep.subr.mxu0 %v830
  %v832 = vand.u32 %v40, 4294901760
  %833 = vmatpush1.msra.mxu0 %v832
  %834 = vmatprep.subr.mxu0 0.0
  %835 = vmatpush2.msra.mxu0 0.0
  %836 = vmatprep.subr.mxu0 0.0
  %837 = vmatpush2.msra.mxu0 0.0
  %838 = vmatprep.subr.mxu0 0.0
  %839 = vmatpush2.msra.mxu0 0.0
  %840 = vmatprep.subr.mxu0 0.0
  %841 = vmatpush2.msra.mxu0 0.0
  %842 = vmatprep.subr.mxu0 0.0
  %843 = vmatpush2.msra.mxu0 0.0
  %844 = vmatprep.subr.mxu0 0.0
  %845 = vmatpush2.msra.mxu0 0.0
  %846 = vmatprep.subr.mxu0 0.0
  %847 = vmatpush2.msra.mxu0 0.0
  %848 = vmatprep.subr.mxu0 0.0
  %849 = vmatpush2.msra.mxu0 0.0
  %850 = vmatprep.subr.mxu0 0.0
  %851 = vmatpush2.msra.mxu0 0.0
  %852 = vmatprep.subr.mxu0 0.0
  %853 = vmatpush2.msra.mxu0 0.0
  %854 = vmatprep.subr.mxu0 0.0
  %855 = vmatpush2.msra.mxu0 0.0
  %856 = vmatprep.subr.mxu0 0.0
  %857 = vmatpush2.msra.mxu0 0.0
  %858 = vmatprep.subr.mxu0 0.0
  %859 = vmatpush2.msra.mxu0 0.0
  %860 = vmatprep.subr.mxu0 0.0
  %861 = vmatpush2.msra.mxu0 0.0
  %862 = vmatprep.subr.mxu0 0.0
  %863 = vmatpush2.msra.mxu0 0.0
  %864 = vmatprep.subr.mxu0 0.0
  %865 = vmatpush2.msra.mxu0 0.0
  %866 = vmatprep.mubr.f32.mxu0 0.0
  %v867 = vand.u32 %v199, 4294901760
  %868 = vmatmul.mubr.f32.gmra.mxu0 %v867
  %v869 = vpop.f32.mrf.mxu0
  %v870 = vadd.f32 %v780, %v869
  %v871 = vpop.f32.mrf.mxu0
  %v872 = vadd.f32 %v782, %v871
  %873 = vdwg.mxu0
  %874 = vrot.lane.b32.xlu0 %v870, 17
  %v875 = vpop.permute.xlu0 %874
  %876 = vrot.lane.b32.xlu0 %v872, 17
  %v877 = vpop.permute.xlu0 %876
  %v878 = vsel %vm25, %v875, %v877
  %v879 = vsel %vm25, %v877, %v875
  %v880 = vmul.f32 %v879, %v33
  %v881 = vmul.f32 %v878, %v37
  %882 = vrot.lane.b32.xlu0 %v870, 16
  %v883 = vpop.permute.xlu0 %882
  %884 = vrot.lane.b32.xlu0 %v872, 16
  %v885 = vpop.permute.xlu0 %884
  %v886 = vsel %vm46, %v883, %v885
  %v887 = vsel %vm46, %v885, %v883
  %v888 = vmul.f32 %v887, %v55
  %v889 = vmul.f32 %v886, %v59
  %890 = vrot.lane.b32.xlu0 %v870, 15
  %v891 = vpop.permute.xlu0 %890
  %892 = vrot.lane.b32.xlu0 %v872, 15
  %v893 = vpop.permute.xlu0 %892
  %v894 = vsel %vm68, %v891, %v893
  %v895 = vsel %vm68, %v893, %v891
  %v896 = vmul.f32 %v895, %v77
  %v897 = vmul.f32 %v894, %v81
  %898 = vrot.lane.b32.xlu0 %v870, 1
  %v899 = vpop.permute.xlu0 %898
  %900 = vrot.lane.b32.xlu0 %v872, 1
  %v901 = vpop.permute.xlu0 %900
  %v902 = vsel %vm90, %v899, %v901
  %v903 = vsel %vm90, %v901, %v899
  %v904 = vmul.f32 %v903, %v99
  %v905 = vmul.f32 %v902, %v103
  %906 = vrot.lane.b32.xlu0 %v870, 127
  %v907 = vpop.permute.xlu0 %906
  %908 = vrot.lane.b32.xlu0 %v872, 127
  %v909 = vpop.permute.xlu0 %908
  %v910 = vsel %vm112, %v907, %v909
  %v911 = vsel %vm112, %v909, %v907
  %v912 = vmul.f32 %v910, %v121
  %v913 = vmul.f32 %v911, %v125
  %914 = vrot.lane.b32.xlu0 %v870, 113
  %v915 = vpop.permute.xlu0 %914
  %916 = vrot.lane.b32.xlu0 %v872, 113
  %v917 = vpop.permute.xlu0 %916
  %v918 = vsel %vm134, %v915, %v917
  %v919 = vsel %vm134, %v917, %v915
  %v920 = vmul.f32 %v918, %v143
  %v921 = vmul.f32 %v919, %v147
  %922 = vrot.lane.b32.xlu0 %v870, 112
  %v923 = vpop.permute.xlu0 %922
  %924 = vrot.lane.b32.xlu0 %v872, 112
  %v925 = vpop.permute.xlu0 %924
  %v926 = vsel %vm156, %v923, %v925
  %v927 = vsel %vm156, %v925, %v923
  %v928 = vmul.f32 %v926, %v165
  %v929 = vmul.f32 %v927, %v169
  %930 = vrot.lane.b32.xlu0 %v870, 111
  %v931 = vpop.permute.xlu0 %930
  %932 = vrot.lane.b32.xlu0 %v872, 111
  %v933 = vpop.permute.xlu0 %932
  %v934 = vsel %vm178, %v931, %v933
  %v935 = vsel %vm178, %v933, %v931
  %v936 = vmul.f32 %v934, %v187
  %v937 = vmul.f32 %v935, %v191
  %s938 = scalar_lea.vmem %s1, 8
  %v939 = vld [vmem:[%s938] sm:$0xff]
  %v941 = vsel %vm197, %v939, 0
  %943 = vmatprep.subr.mxu0 0.0
  %944 = vmatpush1.msra.mxu0 0.0
  %945 = vmatprep.subr.mxu0 0.0
  %946 = vmatpush1.msra.mxu0 0.0
  %947 = vmatprep.subr.mxu0 0.0
  %948 = vmatpush1.msra.mxu0 0.0
  %949 = vmatprep.subr.mxu0 0.0
  %950 = vmatpush1.msra.mxu0 0.0
  %951 = vmatprep.subr.mxu0 0.0
  %952 = vmatpush1.msra.mxu0 0.0
  %953 = vmatprep.subr.mxu0 0.0
  %954 = vmatpush1.msra.mxu0 0.0
  %955 = vmatprep.subr.mxu0 0.0
  %956 = vmatpush1.msra.mxu0 0.0
  %v957 = vand.u32 %v937, 4294901760
  %958 = vmatprep.subr.mxu0 %v957
  %v959 = vand.u32 %v936, 4294901760
  %960 = vmatpush1.msra.mxu0 %v959
  %v961 = vand.u32 %v929, 4294901760
  %962 = vmatprep.subr.mxu0 %v961
  %v963 = vand.u32 %v928, 4294901760
  %964 = vmatpush1.msra.mxu0 %v963
  %v965 = vand.u32 %v921, 4294901760
  %966 = vmatprep.subr.mxu0 %v965
  %v967 = vand.u32 %v920, 4294901760
  %968 = vmatpush1.msra.mxu0 %v967
  %v969 = vand.u32 %v913, 4294901760
  %970 = vmatprep.subr.mxu0 %v969
  %v971 = vand.u32 %v912, 4294901760
  %972 = vmatpush1.msra.mxu0 %v971
  %v973 = vand.u32 %v872, 4294901760
  %974 = vmatprep.subr.mxu0 %v973
  %v975 = vand.u32 %v870, 4294901760
  %976 = vmatpush1.msra.mxu0 %v975
  %v977 = vand.u32 %v905, 4294901760
  %978 = vmatprep.subr.mxu0 %v977
  %v979 = vand.u32 %v904, 4294901760
  %980 = vmatpush1.msra.mxu0 %v979
  %v981 = vand.u32 %v897, 4294901760
  %982 = vmatprep.subr.mxu0 %v981
  %v983 = vand.u32 %v896, 4294901760
  %984 = vmatpush1.msra.mxu0 %v983
  %v985 = vand.u32 %v889, 4294901760
  %986 = vmatprep.subr.mxu0 %v985
  %v987 = vand.u32 %v888, 4294901760
  %988 = vmatpush1.msra.mxu0 %v987
  %v989 = vand.u32 %v881, 4294901760
  %990 = vmatprep.subr.mxu0 %v989
  %v991 = vand.u32 %v880, 4294901760
  %992 = vmatpush1.msra.mxu0 %v991
  %993 = vmatprep.subr.mxu0 0.0
  %994 = vmatpush2.msra.mxu0 0.0
  %995 = vmatprep.subr.mxu0 0.0
  %996 = vmatpush2.msra.mxu0 0.0
  %997 = vmatprep.subr.mxu0 0.0
  %998 = vmatpush2.msra.mxu0 0.0
  %999 = vmatprep.subr.mxu0 0.0
  %1000 = vmatpush2.msra.mxu0 0.0
  %1001 = vmatprep.subr.mxu0 0.0
  %1002 = vmatpush2.msra.mxu0 0.0
  %1003 = vmatprep.subr.mxu0 0.0
  %1004 = vmatpush2.msra.mxu0 0.0
  %1005 = vmatprep.subr.mxu0 0.0
  %1006 = vmatpush2.msra.mxu0 0.0
  %1007 = vmatprep.subr.mxu0 0.0
  %1008 = vmatpush2.msra.mxu0 0.0
  %1009 = vmatprep.subr.mxu0 0.0
  %1010 = vmatpush2.msra.mxu0 0.0
  %1011 = vmatprep.subr.mxu0 0.0
  %1012 = vmatpush2.msra.mxu0 0.0
  %1013 = vmatprep.subr.mxu0 0.0
  %1014 = vmatpush2.msra.mxu0 0.0
  %1015 = vmatprep.subr.mxu0 0.0
  %1016 = vmatpush2.msra.mxu0 0.0
  %1017 = vmatprep.subr.mxu0 0.0
  %1018 = vmatpush2.msra.mxu0 0.0
  %1019 = vmatprep.subr.mxu0 0.0
  %1020 = vmatpush2.msra.mxu0 0.0
  %1021 = vmatprep.subr.mxu0 0.0
  %1022 = vmatpush2.msra.mxu0 0.0
  %1023 = vmatprep.subr.mxu0 0.0
  %1024 = vmatpush2.msra.mxu0 0.0
  %1025 = vmatprep.mubr.f32.mxu0 0.0
  %v1026 = vand.u32 %v941, 4294901760
  %v1027 = vsub.f32 %v941, %v1026
  %v1028 = vand.u32 %v1027, 4294901760
  %v1029 = vsub.f32 %v1027, %v1028
  %v1030 = vand.u32 %v1029, 4294901760
  %1031 = vmatmul.mubr.f32.gmra.mxu0 %v1030
  %v1032 = vpop.f32.mrf.mxu0
  %v1033 = vadd.f32 0.0, %v1032
  %v1034 = vpop.f32.mrf.mxu0
  %v1035 = vadd.f32 0.0, %v1034
  %1036 = vdwg.mxu0
  %1037 = vmatprep.subr.mxu0 0.0
  %1038 = vmatpush1.msra.mxu0 0.0
  %1039 = vmatprep.subr.mxu0 0.0
  %1040 = vmatpush1.msra.mxu0 0.0
  %1041 = vmatprep.subr.mxu0 0.0
  %1042 = vmatpush1.msra.mxu0 0.0
  %1043 = vmatprep.subr.mxu0 0.0
  %1044 = vmatpush1.msra.mxu0 0.0
  %1045 = vmatprep.subr.mxu0 0.0
  %1046 = vmatpush1.msra.mxu0 0.0
  %1047 = vmatprep.subr.mxu0 0.0
  %1048 = vmatpush1.msra.mxu0 0.0
  %1049 = vmatprep.subr.mxu0 0.0
  %1050 = vmatpush1.msra.mxu0 0.0
  %v1051 = vand.u32 %v937, 4294901760
  %v1052 = vsub.f32 %v937, %v1051
  %v1053 = vand.u32 %v1052, 4294901760
  %v1054 = vsub.f32 %v1052, %v1053
  %v1055 = vand.u32 %v1054, 4294901760
  %1056 = vmatprep.subr.mxu0 %v1055
  %v1057 = vand.u32 %v936, 4294901760
  %v1058 = vsub.f32 %v936, %v1057
  %v1059 = vand.u32 %v1058, 4294901760
  %v1060 = vsub.f32 %v1058, %v1059
  %v1061 = vand.u32 %v1060, 4294901760
  %1062 = vmatpush1.msra.mxu0 %v1061
  %v1063 = vand.u32 %v929, 4294901760
  %v1064 = vsub.f32 %v929, %v1063
  %v1065 = vand.u32 %v1064, 4294901760
  %v1066 = vsub.f32 %v1064, %v1065
  %v1067 = vand.u32 %v1066, 4294901760
  %1068 = vmatprep.subr.mxu0 %v1067
  %v1069 = vand.u32 %v928, 4294901760
  %v1070 = vsub.f32 %v928, %v1069
  %v1071 = vand.u32 %v1070, 4294901760
  %v1072 = vsub.f32 %v1070, %v1071
  %v1073 = vand.u32 %v1072, 4294901760
  %1074 = vmatpush1.msra.mxu0 %v1073
  %v1075 = vand.u32 %v921, 4294901760
  %v1076 = vsub.f32 %v921, %v1075
  %v1077 = vand.u32 %v1076, 4294901760
  %v1078 = vsub.f32 %v1076, %v1077
  %v1079 = vand.u32 %v1078, 4294901760
  %1080 = vmatprep.subr.mxu0 %v1079
  %v1081 = vand.u32 %v920, 4294901760
  %v1082 = vsub.f32 %v920, %v1081
  %v1083 = vand.u32 %v1082, 4294901760
  %v1084 = vsub.f32 %v1082, %v1083
  %v1085 = vand.u32 %v1084, 4294901760
  %1086 = vmatpush1.msra.mxu0 %v1085
  %v1087 = vand.u32 %v913, 4294901760
  %v1088 = vsub.f32 %v913, %v1087
  %v1089 = vand.u32 %v1088, 4294901760
  %v1090 = vsub.f32 %v1088, %v1089
  %v1091 = vand.u32 %v1090, 4294901760
  %1092 = vmatprep.subr.mxu0 %v1091
  %v1093 = vand.u32 %v912, 4294901760
  %v1094 = vsub.f32 %v912, %v1093
  %v1095 = vand.u32 %v1094, 4294901760
  %v1096 = vsub.f32 %v1094, %v1095
  %v1097 = vand.u32 %v1096, 4294901760
  %1098 = vmatpush1.msra.mxu0 %v1097
  %v1099 = vand.u32 %v872, 4294901760
  %v1100 = vsub.f32 %v872, %v1099
  %v1101 = vand.u32 %v1100, 4294901760
  %v1102 = vsub.f32 %v1100, %v1101
  %v1103 = vand.u32 %v1102, 4294901760
  %1104 = vmatprep.subr.mxu0 %v1103
  %v1105 = vand.u32 %v870, 4294901760
  %v1106 = vsub.f32 %v870, %v1105
  %v1107 = vand.u32 %v1106, 4294901760
  %v1108 = vsub.f32 %v1106, %v1107
  %v1109 = vand.u32 %v1108, 4294901760
  %1110 = vmatpush1.msra.mxu0 %v1109
  %v1111 = vand.u32 %v905, 4294901760
  %v1112 = vsub.f32 %v905, %v1111
  %v1113 = vand.u32 %v1112, 4294901760
  %v1114 = vsub.f32 %v1112, %v1113
  %v1115 = vand.u32 %v1114, 4294901760
  %1116 = vmatprep.subr.mxu0 %v1115
  %v1117 = vand.u32 %v904, 4294901760
  %v1118 = vsub.f32 %v904, %v1117
  %v1119 = vand.u32 %v1118, 4294901760
  %v1120 = vsub.f32 %v1118, %v1119
  %v1121 = vand.u32 %v1120, 4294901760
  %1122 = vmatpush1.msra.mxu0 %v1121
  %v1123 = vand.u32 %v897, 4294901760
  %v1124 = vsub.f32 %v897, %v1123
  %v1125 = vand.u32 %v1124, 4294901760
  %v1126 = vsub.f32 %v1124, %v1125
  %v1127 = vand.u32 %v1126, 4294901760
  %1128 = vmatprep.subr.mxu0 %v1127
  %v1129 = vand.u32 %v896, 4294901760
  %v1130 = vsub.f32 %v896, %v1129
  %v1131 = vand.u32 %v1130, 4294901760
  %v1132 = vsub.f32 %v1130, %v1131
  %v1133 = vand.u32 %v1132, 4294901760
  %1134 = vmatpush1.msra.mxu0 %v1133
  %v1135 = vand.u32 %v889, 4294901760
  %v1136 = vsub.f32 %v889, %v1135
  %v1137 = vand.u32 %v1136, 4294901760
  %v1138 = vsub.f32 %v1136, %v1137
  %v1139 = vand.u32 %v1138, 4294901760
  %1140 = vmatprep.subr.mxu0 %v1139
  %v1141 = vand.u32 %v888, 4294901760
  %v1142 = vsub.f32 %v888, %v1141
  %v1143 = vand.u32 %v1142, 4294901760
  %v1144 = vsub.f32 %v1142, %v1143
  %v1145 = vand.u32 %v1144, 4294901760
  %1146 = vmatpush1.msra.mxu0 %v1145
  %v1147 = vand.u32 %v881, 4294901760
  %v1148 = vsub.f32 %v881, %v1147
  %v1149 = vand.u32 %v1148, 4294901760
  %v1150 = vsub.f32 %v1148, %v1149
  %v1151 = vand.u32 %v1150, 4294901760
  %1152 = vmatprep.subr.mxu0 %v1151
  %v1153 = vand.u32 %v880, 4294901760
  %v1154 = vsub.f32 %v880, %v1153
  %v1155 = vand.u32 %v1154, 4294901760
  %v1156 = vsub.f32 %v1154, %v1155
  %v1157 = vand.u32 %v1156, 4294901760
  %1158 = vmatpush1.msra.mxu0 %v1157
  %1159 = vmatprep.subr.mxu0 0.0
  %1160 = vmatpush2.msra.mxu0 0.0
  %1161 = vmatprep.subr.mxu0 0.0
  %1162 = vmatpush2.msra.mxu0 0.0
  %1163 = vmatprep.subr.mxu0 0.0
  %1164 = vmatpush2.msra.mxu0 0.0
  %1165 = vmatprep.subr.mxu0 0.0
  %1166 = vmatpush2.msra.mxu0 0.0
  %1167 = vmatprep.subr.mxu0 0.0
  %1168 = vmatpush2.msra.mxu0 0.0
  %1169 = vmatprep.subr.mxu0 0.0
  %1170 = vmatpush2.msra.mxu0 0.0
  %1171 = vmatprep.subr.mxu0 0.0
  %1172 = vmatpush2.msra.mxu0 0.0
  %1173 = vmatprep.subr.mxu0 0.0
  %1174 = vmatpush2.msra.mxu0 0.0
  %1175 = vmatprep.subr.mxu0 0.0
  %1176 = vmatpush2.msra.mxu0 0.0
  %1177 = vmatprep.subr.mxu0 0.0
  %1178 = vmatpush2.msra.mxu0 0.0
  %1179 = vmatprep.subr.mxu0 0.0
  %1180 = vmatpush2.msra.mxu0 0.0
  %1181 = vmatprep.subr.mxu0 0.0
  %1182 = vmatpush2.msra.mxu0 0.0
  %1183 = vmatprep.subr.mxu0 0.0
  %1184 = vmatpush2.msra.mxu0 0.0
  %1185 = vmatprep.subr.mxu0 0.0
  %1186 = vmatpush2.msra.mxu0 0.0
  %1187 = vmatprep.subr.mxu0 0.0
  %1188 = vmatpush2.msra.mxu0 0.0
  %1189 = vmatprep.subr.mxu0 0.0
  %1190 = vmatpush2.msra.mxu0 0.0
  %1191 = vmatprep.mubr.f32.mxu0 0.0
  %v1192 = vand.u32 %v941, 4294901760
  %1193 = vmatmul.mubr.f32.gmra.mxu0 %v1192
  %v1194 = vpop.f32.mrf.mxu0
  %v1195 = vadd.f32 %v1033, %v1194
  %v1196 = vpop.f32.mrf.mxu0
  %v1197 = vadd.f32 %v1035, %v1196
  %1198 = vdwg.mxu0
  %1199 = vmatprep.subr.mxu0 0.0
  %1200 = vmatpush1.msra.mxu0 0.0
  %1201 = vmatprep.subr.mxu0 0.0
  %1202 = vmatpush1.msra.mxu0 0.0
  %1203 = vmatprep.subr.mxu0 0.0
  %1204 = vmatpush1.msra.mxu0 0.0
  %1205 = vmatprep.subr.mxu0 0.0
  %1206 = vmatpush1.msra.mxu0 0.0
  %1207 = vmatprep.subr.mxu0 0.0
  %1208 = vmatpush1.msra.mxu0 0.0
  %1209 = vmatprep.subr.mxu0 0.0
  %1210 = vmatpush1.msra.mxu0 0.0
  %1211 = vmatprep.subr.mxu0 0.0
  %1212 = vmatpush1.msra.mxu0 0.0
  %v1213 = vand.u32 %v937, 4294901760
  %v1214 = vsub.f32 %v937, %v1213
  %1215 = vmatprep.subr.mxu0 %v1214
  %v1216 = vand.u32 %v936, 4294901760
  %v1217 = vsub.f32 %v936, %v1216
  %1218 = vmatpush1.msra.mxu0 %v1217
  %v1219 = vand.u32 %v929, 4294901760
  %v1220 = vsub.f32 %v929, %v1219
  %1221 = vmatprep.subr.mxu0 %v1220
  %v1222 = vand.u32 %v928, 4294901760
  %v1223 = vsub.f32 %v928, %v1222
  %1224 = vmatpush1.msra.mxu0 %v1223
  %v1225 = vand.u32 %v921, 4294901760
  %v1226 = vsub.f32 %v921, %v1225
  %1227 = vmatprep.subr.mxu0 %v1226
  %v1228 = vand.u32 %v920, 4294901760
  %v1229 = vsub.f32 %v920, %v1228
  %1230 = vmatpush1.msra.mxu0 %v1229
  %v1231 = vand.u32 %v913, 4294901760
  %v1232 = vsub.f32 %v913, %v1231
  %1233 = vmatprep.subr.mxu0 %v1232
  %v1234 = vand.u32 %v912, 4294901760
  %v1235 = vsub.f32 %v912, %v1234
  %1236 = vmatpush1.msra.mxu0 %v1235
  %v1237 = vand.u32 %v872, 4294901760
  %v1238 = vsub.f32 %v872, %v1237
  %1239 = vmatprep.subr.mxu0 %v1238
  %v1240 = vand.u32 %v870, 4294901760
  %v1241 = vsub.f32 %v870, %v1240
  %1242 = vmatpush1.msra.mxu0 %v1241
  %v1243 = vand.u32 %v905, 4294901760
  %v1244 = vsub.f32 %v905, %v1243
  %1245 = vmatprep.subr.mxu0 %v1244
  %v1246 = vand.u32 %v904, 4294901760
  %v1247 = vsub.f32 %v904, %v1246
  %1248 = vmatpush1.msra.mxu0 %v1247
  %v1249 = vand.u32 %v897, 4294901760
  %v1250 = vsub.f32 %v897, %v1249
  %1251 = vmatprep.subr.mxu0 %v1250
  %v1252 = vand.u32 %v896, 4294901760
  %v1253 = vsub.f32 %v896, %v1252
  %1254 = vmatpush1.msra.mxu0 %v1253
  %v1255 = vand.u32 %v889, 4294901760
  %v1256 = vsub.f32 %v889, %v1255
  %1257 = vmatprep.subr.mxu0 %v1256
  %v1258 = vand.u32 %v888, 4294901760
  %v1259 = vsub.f32 %v888, %v1258
  %1260 = vmatpush1.msra.mxu0 %v1259
  %v1261 = vand.u32 %v881, 4294901760
  %v1262 = vsub.f32 %v881, %v1261
  %1263 = vmatprep.subr.mxu0 %v1262
  %v1264 = vand.u32 %v880, 4294901760
  %v1265 = vsub.f32 %v880, %v1264
  %1266 = vmatpush1.msra.mxu0 %v1265
  %1267 = vmatprep.subr.mxu0 0.0
  %1268 = vmatpush2.msra.mxu0 0.0
  %1269 = vmatprep.subr.mxu0 0.0
  %1270 = vmatpush2.msra.mxu0 0.0
  %1271 = vmatprep.subr.mxu0 0.0
  %1272 = vmatpush2.msra.mxu0 0.0
  %1273 = vmatprep.subr.mxu0 0.0
  %1274 = vmatpush2.msra.mxu0 0.0
  %1275 = vmatprep.subr.mxu0 0.0
  %1276 = vmatpush2.msra.mxu0 0.0
  %1277 = vmatprep.subr.mxu0 0.0
  %1278 = vmatpush2.msra.mxu0 0.0
  %1279 = vmatprep.subr.mxu0 0.0
  %1280 = vmatpush2.msra.mxu0 0.0
  %1281 = vmatprep.subr.mxu0 0.0
  %1282 = vmatpush2.msra.mxu0 0.0
  %1283 = vmatprep.subr.mxu0 0.0
  %1284 = vmatpush2.msra.mxu0 0.0
  %1285 = vmatprep.subr.mxu0 0.0
  %1286 = vmatpush2.msra.mxu0 0.0
  %1287 = vmatprep.subr.mxu0 0.0
  %1288 = vmatpush2.msra.mxu0 0.0
  %1289 = vmatprep.subr.mxu0 0.0
  %1290 = vmatpush2.msra.mxu0 0.0
  %1291 = vmatprep.subr.mxu0 0.0
  %1292 = vmatpush2.msra.mxu0 0.0
  %1293 = vmatprep.subr.mxu0 0.0
  %1294 = vmatpush2.msra.mxu0 0.0
  %1295 = vmatprep.subr.mxu0 0.0
  %1296 = vmatpush2.msra.mxu0 0.0
  %1297 = vmatprep.subr.mxu0 0.0
  %1298 = vmatpush2.msra.mxu0 0.0
  %1299 = vmatprep.mubr.f32.mxu0 0.0
  %v1300 = vand.u32 %v941, 4294901760
  %v1301 = vsub.f32 %v941, %v1300
  %1302 = vmatmul.mubr.f32.gmra.mxu0 %v1301
  %v1303 = vpop.f32.mrf.mxu0
  %v1304 = vadd.f32 %v1195, %v1303
  %v1305 = vpop.f32.mrf.mxu0
  %v1306 = vadd.f32 %v1197, %v1305
  %1307 = vdwg.mxu0
  %1308 = vmatprep.subr.mxu0 0.0
  %1309 = vmatpush1.msra.mxu0 0.0
  %1310 = vmatprep.subr.mxu0 0.0
  %1311 = vmatpush1.msra.mxu0 0.0
  %1312 = vmatprep.subr.mxu0 0.0
  %1313 = vmatpush1.msra.mxu0 0.0
  %1314 = vmatprep.subr.mxu0 0.0
  %1315 = vmatpush1.msra.mxu0 0.0
  %1316 = vmatprep.subr.mxu0 0.0
  %1317 = vmatpush1.msra.mxu0 0.0
  %1318 = vmatprep.subr.mxu0 0.0
  %1319 = vmatpush1.msra.mxu0 0.0
  %1320 = vmatprep.subr.mxu0 0.0
  %1321 = vmatpush1.msra.mxu0 0.0
  %v1322 = vand.u32 %v937, 4294901760
  %1323 = vmatprep.subr.mxu0 %v1322
  %v1324 = vand.u32 %v936, 4294901760
  %1325 = vmatpush1.msra.mxu0 %v1324
  %v1326 = vand.u32 %v929, 4294901760
  %1327 = vmatprep.subr.mxu0 %v1326
  %v1328 = vand.u32 %v928, 4294901760
  %1329 = vmatpush1.msra.mxu0 %v1328
  %v1330 = vand.u32 %v921, 4294901760
  %1331 = vmatprep.subr.mxu0 %v1330
  %v1332 = vand.u32 %v920, 4294901760
  %1333 = vmatpush1.msra.mxu0 %v1332
  %v1334 = vand.u32 %v913, 4294901760
  %1335 = vmatprep.subr.mxu0 %v1334
  %v1336 = vand.u32 %v912, 4294901760
  %1337 = vmatpush1.msra.mxu0 %v1336
  %v1338 = vand.u32 %v872, 4294901760
  %1339 = vmatprep.subr.mxu0 %v1338
  %v1340 = vand.u32 %v870, 4294901760
  %1341 = vmatpush1.msra.mxu0 %v1340
  %v1342 = vand.u32 %v905, 4294901760
  %1343 = vmatprep.subr.mxu0 %v1342
  %v1344 = vand.u32 %v904, 4294901760
  %1345 = vmatpush1.msra.mxu0 %v1344
  %v1346 = vand.u32 %v897, 4294901760
  %1347 = vmatprep.subr.mxu0 %v1346
  %v1348 = vand.u32 %v896, 4294901760
  %1349 = vmatpush1.msra.mxu0 %v1348
  %v1350 = vand.u32 %v889, 4294901760
  %1351 = vmatprep.subr.mxu0 %v1350
  %v1352 = vand.u32 %v888, 4294901760
  %1353 = vmatpush1.msra.mxu0 %v1352
  %v1354 = vand.u32 %v881, 4294901760
  %1355 = vmatprep.subr.mxu0 %v1354
  %v1356 = vand.u32 %v880, 4294901760
  %1357 = vmatpush1.msra.mxu0 %v1356
  %1358 = vmatprep.subr.mxu0 0.0
  %1359 = vmatpush2.msra.mxu0 0.0
  %1360 = vmatprep.subr.mxu0 0.0
  %1361 = vmatpush2.msra.mxu0 0.0
  %1362 = vmatprep.subr.mxu0 0.0
  %1363 = vmatpush2.msra.mxu0 0.0
  %1364 = vmatprep.subr.mxu0 0.0
  %1365 = vmatpush2.msra.mxu0 0.0
  %1366 = vmatprep.subr.mxu0 0.0
  %1367 = vmatpush2.msra.mxu0 0.0
  %1368 = vmatprep.subr.mxu0 0.0
  %1369 = vmatpush2.msra.mxu0 0.0
  %1370 = vmatprep.subr.mxu0 0.0
  %1371 = vmatpush2.msra.mxu0 0.0
  %1372 = vmatprep.subr.mxu0 0.0
  %1373 = vmatpush2.msra.mxu0 0.0
  %1374 = vmatprep.subr.mxu0 0.0
  %1375 = vmatpush2.msra.mxu0 0.0
  %1376 = vmatprep.subr.mxu0 0.0
  %1377 = vmatpush2.msra.mxu0 0.0
  %1378 = vmatprep.subr.mxu0 0.0
  %1379 = vmatpush2.msra.mxu0 0.0
  %1380 = vmatprep.subr.mxu0 0.0
  %1381 = vmatpush2.msra.mxu0 0.0
  %1382 = vmatprep.subr.mxu0 0.0
  %1383 = vmatpush2.msra.mxu0 0.0
  %1384 = vmatprep.subr.mxu0 0.0
  %1385 = vmatpush2.msra.mxu0 0.0
  %1386 = vmatprep.subr.mxu0 0.0
  %1387 = vmatpush2.msra.mxu0 0.0
  %1388 = vmatprep.subr.mxu0 0.0
  %1389 = vmatpush2.msra.mxu0 0.0
  %1390 = vmatprep.mubr.f32.mxu0 0.0
  %v1391 = vand.u32 %v941, 4294901760
  %v1392 = vsub.f32 %v941, %v1391
  %v1393 = vand.u32 %v1392, 4294901760
  %1394 = vmatmul.mubr.f32.gmra.mxu0 %v1393
  %v1395 = vpop.f32.mrf.mxu0
  %v1396 = vadd.f32 %v1304, %v1395
  %v1397 = vpop.f32.mrf.mxu0
  %v1398 = vadd.f32 %v1306, %v1397
  %1399 = vdwg.mxu0
  %1400 = vmatprep.subr.mxu0 0.0
  %1401 = vmatpush1.msra.mxu0 0.0
  %1402 = vmatprep.subr.mxu0 0.0
  %1403 = vmatpush1.msra.mxu0 0.0
  %1404 = vmatprep.subr.mxu0 0.0
  %1405 = vmatpush1.msra.mxu0 0.0
  %1406 = vmatprep.subr.mxu0 0.0
  %1407 = vmatpush1.msra.mxu0 0.0
  %1408 = vmatprep.subr.mxu0 0.0
  %1409 = vmatpush1.msra.mxu0 0.0
  %1410 = vmatprep.subr.mxu0 0.0
  %1411 = vmatpush1.msra.mxu0 0.0
  %1412 = vmatprep.subr.mxu0 0.0
  %1413 = vmatpush1.msra.mxu0 0.0
  %v1414 = vand.u32 %v937, 4294901760
  %v1415 = vsub.f32 %v937, %v1414
  %v1416 = vand.u32 %v1415, 4294901760
  %1417 = vmatprep.subr.mxu0 %v1416
  %v1418 = vand.u32 %v936, 4294901760
  %v1419 = vsub.f32 %v936, %v1418
  %v1420 = vand.u32 %v1419, 4294901760
  %1421 = vmatpush1.msra.mxu0 %v1420
  %v1422 = vand.u32 %v929, 4294901760
  %v1423 = vsub.f32 %v929, %v1422
  %v1424 = vand.u32 %v1423, 4294901760
  %1425 = vmatprep.subr.mxu0 %v1424
  %v1426 = vand.u32 %v928, 4294901760
  %v1427 = vsub.f32 %v928, %v1426
  %v1428 = vand.u32 %v1427, 4294901760
  %1429 = vmatpush1.msra.mxu0 %v1428
  %v1430 = vand.u32 %v921, 4294901760
  %v1431 = vsub.f32 %v921, %v1430
  %v1432 = vand.u32 %v1431, 4294901760
  %1433 = vmatprep.subr.mxu0 %v1432
  %v1434 = vand.u32 %v920, 4294901760
  %v1435 = vsub.f32 %v920, %v1434
  %v1436 = vand.u32 %v1435, 4294901760
  %1437 = vmatpush1.msra.mxu0 %v1436
  %v1438 = vand.u32 %v913, 4294901760
  %v1439 = vsub.f32 %v913, %v1438
  %v1440 = vand.u32 %v1439, 4294901760
  %1441 = vmatprep.subr.mxu0 %v1440
  %v1442 = vand.u32 %v912, 4294901760
  %v1443 = vsub.f32 %v912, %v1442
  %v1444 = vand.u32 %v1443, 4294901760
  %1445 = vmatpush1.msra.mxu0 %v1444
  %v1446 = vand.u32 %v872, 4294901760
  %v1447 = vsub.f32 %v872, %v1446
  %v1448 = vand.u32 %v1447, 4294901760
  %1449 = vmatprep.subr.mxu0 %v1448
  %v1450 = vand.u32 %v870, 4294901760
  %v1451 = vsub.f32 %v870, %v1450
  %v1452 = vand.u32 %v1451, 4294901760
  %1453 = vmatpush1.msra.mxu0 %v1452
  %v1454 = vand.u32 %v905, 4294901760
  %v1455 = vsub.f32 %v905, %v1454
  %v1456 = vand.u32 %v1455, 4294901760
  %1457 = vmatprep.subr.mxu0 %v1456
  %v1458 = vand.u32 %v904, 4294901760
  %v1459 = vsub.f32 %v904, %v1458
  %v1460 = vand.u32 %v1459, 4294901760
  %1461 = vmatpush1.msra.mxu0 %v1460
  %v1462 = vand.u32 %v897, 4294901760
  %v1463 = vsub.f32 %v897, %v1462
  %v1464 = vand.u32 %v1463, 4294901760
  %1465 = vmatprep.subr.mxu0 %v1464
  %v1466 = vand.u32 %v896, 4294901760
  %v1467 = vsub.f32 %v896, %v1466
  %v1468 = vand.u32 %v1467, 4294901760
  %1469 = vmatpush1.msra.mxu0 %v1468
  %v1470 = vand.u32 %v889, 4294901760
  %v1471 = vsub.f32 %v889, %v1470
  %v1472 = vand.u32 %v1471, 4294901760
  %1473 = vmatprep.subr.mxu0 %v1472
  %v1474 = vand.u32 %v888, 4294901760
  %v1475 = vsub.f32 %v888, %v1474
  %v1476 = vand.u32 %v1475, 4294901760
  %1477 = vmatpush1.msra.mxu0 %v1476
  %v1478 = vand.u32 %v881, 4294901760
  %v1479 = vsub.f32 %v881, %v1478
  %v1480 = vand.u32 %v1479, 4294901760
  %1481 = vmatprep.subr.mxu0 %v1480
  %v1482 = vand.u32 %v880, 4294901760
  %v1483 = vsub.f32 %v880, %v1482
  %v1484 = vand.u32 %v1483, 4294901760
  %1485 = vmatpush1.msra.mxu0 %v1484
  %1486 = vmatprep.subr.mxu0 0.0
  %1487 = vmatpush2.msra.mxu0 0.0
  %1488 = vmatprep.subr.mxu0 0.0
  %1489 = vmatpush2.msra.mxu0 0.0
  %1490 = vmatprep.subr.mxu0 0.0
  %1491 = vmatpush2.msra.mxu0 0.0
  %1492 = vmatprep.subr.mxu0 0.0
  %1493 = vmatpush2.msra.mxu0 0.0
  %1494 = vmatprep.subr.mxu0 0.0
  %1495 = vmatpush2.msra.mxu0 0.0
  %1496 = vmatprep.subr.mxu0 0.0
  %1497 = vmatpush2.msra.mxu0 0.0
  %1498 = vmatprep.subr.mxu0 0.0
  %1499 = vmatpush2.msra.mxu0 0.0
  %1500 = vmatprep.subr.mxu0 0.0
  %1501 = vmatpush2.msra.mxu0 0.0
  %1502 = vmatprep.subr.mxu0 0.0
  %1503 = vmatpush2.msra.mxu0 0.0
  %1504 = vmatprep.subr.mxu0 0.0
  %1505 = vmatpush2.msra.mxu0 0.0
  %1506 = vmatprep.subr.mxu0 0.0
  %1507 = vmatpush2.msra.mxu0 0.0
  %1508 = vmatprep.subr.mxu0 0.0
  %1509 = vmatpush2.msra.mxu0 0.0
  %1510 = vmatprep.subr.mxu0 0.0
  %1511 = vmatpush2.msra.mxu0 0.0
  %1512 = vmatprep.subr.mxu0 0.0
  %1513 = vmatpush2.msra.mxu0 0.0
  %1514 = vmatprep.subr.mxu0 0.0
  %1515 = vmatpush2.msra.mxu0 0.0
  %1516 = vmatprep.subr.mxu0 0.0
  %1517 = vmatpush2.msra.mxu0 0.0
  %1518 = vmatprep.mubr.f32.mxu0 0.0
  %v1519 = vand.u32 %v941, 4294901760
  %1520 = vmatmul.mubr.f32.gmra.mxu0 %v1519
  %v1521 = vpop.f32.mrf.mxu0
  %v1522 = vadd.f32 %v1396, %v1521
  %v1523 = vpop.f32.mrf.mxu0
  %v1524 = vadd.f32 %v1398, %v1523
  %1525 = vdwg.mxu0
  %1526 = vmatprep.subr.mxu0 0.0
  %1527 = vmatpush1.msra.mxu0 0.0
  %1528 = vmatprep.subr.mxu0 0.0
  %1529 = vmatpush1.msra.mxu0 0.0
  %1530 = vmatprep.subr.mxu0 0.0
  %1531 = vmatpush1.msra.mxu0 0.0
  %1532 = vmatprep.subr.mxu0 0.0
  %1533 = vmatpush1.msra.mxu0 0.0
  %1534 = vmatprep.subr.mxu0 0.0
  %1535 = vmatpush1.msra.mxu0 0.0
  %1536 = vmatprep.subr.mxu0 0.0
  %1537 = vmatpush1.msra.mxu0 0.0
  %1538 = vmatprep.subr.mxu0 0.0
  %1539 = vmatpush1.msra.mxu0 0.0
  %v1540 = vand.u32 %v937, 4294901760
  %1541 = vmatprep.subr.mxu0 %v1540
  %v1542 = vand.u32 %v936, 4294901760
  %1543 = vmatpush1.msra.mxu0 %v1542
  %v1544 = vand.u32 %v929, 4294901760
  %1545 = vmatprep.subr.mxu0 %v1544
  %v1546 = vand.u32 %v928, 4294901760
  %1547 = vmatpush1.msra.mxu0 %v1546
  %v1548 = vand.u32 %v921, 4294901760
  %1549 = vmatprep.subr.mxu0 %v1548
  %v1550 = vand.u32 %v920, 4294901760
  %1551 = vmatpush1.msra.mxu0 %v1550
  %v1552 = vand.u32 %v913, 4294901760
  %1553 = vmatprep.subr.mxu0 %v1552
  %v1554 = vand.u32 %v912, 4294901760
  %1555 = vmatpush1.msra.mxu0 %v1554
  %v1556 = vand.u32 %v872, 4294901760
  %1557 = vmatprep.subr.mxu0 %v1556
  %v1558 = vand.u32 %v870, 4294901760
  %1559 = vmatpush1.msra.mxu0 %v1558
  %v1560 = vand.u32 %v905, 4294901760
  %1561 = vmatprep.subr.mxu0 %v1560
  %v1562 = vand.u32 %v904, 4294901760
  %1563 = vmatpush1.msra.mxu0 %v1562
  %v1564 = vand.u32 %v897, 4294901760
  %1565 = vmatprep.subr.mxu0 %v1564
  %v1566 = vand.u32 %v896, 4294901760
  %1567 = vmatpush1.msra.mxu0 %v1566
  %v1568 = vand.u32 %v889, 4294901760
  %1569 = vmatprep.subr.mxu0 %v1568
  %v1570 = vand.u32 %v888, 4294901760
  %1571 = vmatpush1.msra.mxu0 %v1570
  %v1572 = vand.u32 %v881, 4294901760
  %1573 = vmatprep.subr.mxu0 %v1572
  %v1574 = vand.u32 %v880, 4294901760
  %1575 = vmatpush1.msra.mxu0 %v1574
  %1576 = vmatprep.subr.mxu0 0.0
  %1577 = vmatpush2.msra.mxu0 0.0
  %1578 = vmatprep.subr.mxu0 0.0
  %1579 = vmatpush2.msra.mxu0 0.0
  %1580 = vmatprep.subr.mxu0 0.0
  %1581 = vmatpush2.msra.mxu0 0.0
  %1582 = vmatprep.subr.mxu0 0.0
  %1583 = vmatpush2.msra.mxu0 0.0
  %1584 = vmatprep.subr.mxu0 0.0
  %1585 = vmatpush2.msra.mxu0 0.0
  %1586 = vmatprep.subr.mxu0 0.0
  %1587 = vmatpush2.msra.mxu0 0.0
  %1588 = vmatprep.subr.mxu0 0.0
  %1589 = vmatpush2.msra.mxu0 0.0
  %1590 = vmatprep.subr.mxu0 0.0
  %1591 = vmatpush2.msra.mxu0 0.0
  %1592 = vmatprep.subr.mxu0 0.0
  %1593 = vmatpush2.msra.mxu0 0.0
  %1594 = vmatprep.subr.mxu0 0.0
  %1595 = vmatpush2.msra.mxu0 0.0
  %1596 = vmatprep.subr.mxu0 0.0
  %1597 = vmatpush2.msra.mxu0 0.0
  %1598 = vmatprep.subr.mxu0 0.0
  %1599 = vmatpush2.msra.mxu0 0.0
  %1600 = vmatprep.subr.mxu0 0.0
  %1601 = vmatpush2.msra.mxu0 0.0
  %1602 = vmatprep.subr.mxu0 0.0
  %1603 = vmatpush2.msra.mxu0 0.0
  %1604 = vmatprep.subr.mxu0 0.0
  %1605 = vmatpush2.msra.mxu0 0.0
  %1606 = vmatprep.subr.mxu0 0.0
  %1607 = vmatpush2.msra.mxu0 0.0
  %1608 = vmatprep.mubr.f32.mxu0 0.0
  %v1609 = vand.u32 %v941, 4294901760
  %1610 = vmatmul.mubr.f32.gmra.mxu0 %v1609
  %v1611 = vpop.f32.mrf.mxu0
  %v1612 = vadd.f32 %v1522, %v1611
  %v1613 = vpop.f32.mrf.mxu0
  %v1614 = vadd.f32 %v1524, %v1613
  %1615 = vdwg.mxu0
  %1616 = vst [vmem:[%s3] sm:$0xff] %v1612
  %1617 = vst [vmem:[%s3 + $0x8] sm:$0xff] %v1614
  %v1618 = vadd.f32 %v1612, %v1614
  %1619 = vadd.xlane.f32.xlu0 %v1618
  %v1620 = vpop.xlane.xlu0 %1619
  %vm1621 = vcmask 7168
  %1622 = vst.msk [vmem:[%s4] sm:$0xff] %vm1621, %v1620
  %v1623 = vmul.f32 %v1612, %v1612
  %v1624 = vmul.f32 %v1614, %v1614
  %v1625 = vadd.f32 %v1623, %v1624
  %1626 = vadd.xlane.f32.xlu0 %v1625
  %v1627 = vpop.xlane.xlu0 %1626
  %1628 = vst.msk [vmem:[%s5] sm:$0xff] %vm1621, %v1627
  // Predicated region
  $region14: #{forward.2} parent=0 // pred_check
    _
  $region15: #{forward.2} parent=0 // pred_check_branch
    %1630 = sbr.rel (0) target = $region17
  $region16: #{forward.2} parent=0 // pred_region
    _
  $region17: #{forward.2} parent=0 // pred_fallthru
    _
  // Predicated region
  $region18: #{forward.2} parent=0 // pred_check
    _
  $region19: #{forward.2} parent=0 // pred_check_branch
    %1632 = sbr.rel (0) target = $region21
  $region20: #{forward.2} parent=0 // pred_region
    _
  $region21: #{forward.2} parent=0 // pred_fallthru
    _
  // Predicated region
  $region22: #{forward.2} parent=0 // pred_check
    _
  $region23: #{forward.2} parent=0 // pred_check_branch
    %1634 = sbr.rel (0) target = $region25
  $region24: #{forward.2} parent=0 // pred_region
    _
  $region25: #{forward.2} parent=0 // pred_fallthru
    _
  // Predicated region
  $region26: #{forward.2} parent=0 // pred_check
    _
  $region27: #{forward.2} parent=0 // pred_check_branch
    %1636 = sbr.rel (0) target = $region29
  $region28: #{forward.2} parent=0 // pred_region
    _
  $region29: #{forward.2} parent=0 // pred_fallthru
    _
  // Predicated region
  $region30: #{forward.2} parent=0 // pred_check
    _
  $region31: #{forward.2} parent=0 // pred_check_branch
    %1638 = sbr.rel (0) target = $region33
  $region32: #{forward.2} parent=0 // pred_region
    _
  $region33: #{forward.2} parent=0 // pred_fallthru
    _
  // Predicated region
  $region34: #{forward.2} parent=0 // pred_check
    _
  $region35: #{forward.2} parent=0 // pred_check_branch
    %1640 = sbr.rel (0) target = $region37
  $region36: #{forward.2} parent=0 // pred_region
    _
  $region37: #{forward.2} parent=0 // pred_fallthru
    _

</llo_original>
